<compile_context>
chip_gen: v5e
topology: v5e:2x2
jax: 0.10.0
libtpu: 0.0.40
codegen_flags: <defaults>
</compile_context>

<pallas_src>
import functools
import math

import jax
import jax.numpy as jnp
from jax.experimental import pallas as pl
from jax.experimental.pallas import tpu as pltpu


def _round_up(x, m):
    return ((x + m - 1) // m) * m


def _pad2(a, rows, cols):
    r, c = a.shape
    if r == rows and c == cols:
        return a
    return jnp.pad(a, ((0, rows - r), (0, cols - c)))


def _mlp_kernel_nodrop(x_ref, w1_ref, b1_ref, w2_ref, b2_ref, o_ref):
    # (tile_m, K) @ (K, H) -> (tile_m, H), f32 accumulation on the MXU.
    h = jnp.dot(x_ref[...], w1_ref[...], preferred_element_type=jnp.float32)
    h = jnp.maximum(h + b1_ref[...], 0.0)
    # (tile_m, H) @ (H, N) -> (tile_m, N)
    out = jnp.dot(h.astype(w2_ref.dtype), w2_ref[...],
                  preferred_element_type=jnp.float32)
    o_ref[...] = (out + b2_ref[...]).astype(o_ref.dtype)


def _mlp_kernel_drop(x_ref, mask_ref, w1_ref, b1_ref, w2_ref, b2_ref, o_ref,
                     *, inv_keep):
    h = jnp.dot(x_ref[...], w1_ref[...], preferred_element_type=jnp.float32)
    h = jnp.maximum(h + b1_ref[...], 0.0)
    # Dropout keep-mask (0/1). The 1/(1-p) scale commutes through the second
    # matmul, so it is applied once on the small (tile_m, N) result below.
    h = h * mask_ref[...].astype(jnp.float32)
    out = jnp.dot(h.astype(w2_ref.dtype), w2_ref[...],
                  preferred_element_type=jnp.float32)
    out = out * jnp.float32(inv_keep) + b2_ref[...]
    o_ref[...] = out.astype(o_ref.dtype)


def mlp_forward(x, w1, b1, w2, b2, *, dropout_p=0.1, rng_key=None,
                tile_m_max=256, param_dtype=None):
    """x: (..., n_units). w1: (n_units, 2048), b1: (2048,),
    w2: (2048, n_units), b2: (n_units,).  Weights are stored transposed
    relative to nn.Linear so the kernel computes plain x @ W + b."""
    *lead, K = x.shape
    M = math.prod(lead) if lead else 1
    H = w1.shape[1]
    N = w2.shape[1]
    assert w1.shape == (K, H) and w2.shape == (H, N)
    assert b1.shape == (H,) and b2.shape == (N,)
    assert 0.0 <= dropout_p < 1.0, "dropout_p must be in [0, 1)"

    dtype = param_dtype if param_dtype is not None else x.dtype

    # Lane-dense padding of feature dims; M padded to a multiple of the tile.
    Kp = _round_up(K, 128)
    Hp = _round_up(H, 128)
    Np = _round_up(N, 128)
    tile_m = min(_round_up(M, 8), tile_m_max)   # tile_m_max is a mult. of 128
    Mp = _round_up(M, tile_m)
    n_m = Mp // tile_m

    x2 = _pad2(x.reshape(M, K).astype(dtype), Mp, Kp)
    w1p = _pad2(w1.astype(dtype), Kp, Hp)
    w2p = _pad2(w2.astype(dtype), Hp, Np)
    b1p = _pad2(b1.reshape(1, H).astype(jnp.float32), 1, Hp)
    b2p = _pad2(b2.reshape(1, N).astype(jnp.float32), 1, Np)

    use_dropout = dropout_p > 0.0

    # Shared specs: x / mask / out tiled over M; weights & biases resident.
    x_spec = pl.BlockSpec((tile_m, Kp), lambda m: (m, 0))
    w1_spec = pl.BlockSpec((Kp, Hp), lambda m: (0, 0))
    b1_spec = pl.BlockSpec((1, Hp), lambda m: (0, 0))
    w2_spec = pl.BlockSpec((Hp, Np), lambda m: (0, 0))
    b2_spec = pl.BlockSpec((1, Np), lambda m: (0, 0))
    out_spec = pl.BlockSpec((tile_m, Np), lambda m: (m, 0))

    elt = jnp.dtype(dtype).itemsize
    flops = 2 * Mp * Hp * (Kp + Np)
    bytes_accessed = (Mp * Kp + Kp * Hp + Hp * Np) * elt \
        + (Hp + Np) * 4 + Mp * Np * 4 \
        + (Mp * Hp * elt if use_dropout else 0)
    cost = pl.CostEstimate(flops=flops, transcendentals=0,
                           bytes_accessed=bytes_accessed)

    compiler_params = pltpu.CompilerParams(
        dimension_semantics=("parallel",),
        vmem_limit_bytes=48 * 1024 * 1024,
    )

    if use_dropout:
        if rng_key is None:
            rng_key = jax.random.PRNGKey(0)
        keep_mask = jax.random.bernoulli(
            rng_key, 1.0 - dropout_p, (Mp, Hp)).astype(dtype)
        kernel = functools.partial(_mlp_kernel_drop,
                                   inv_keep=1.0 / (1.0 - dropout_p))
        in_specs = [x_spec,
                    pl.BlockSpec((tile_m, Hp), lambda m: (m, 0)),
                    w1_spec, b1_spec, w2_spec, b2_spec]
        args = (x2, keep_mask, w1p, b1p, w2p, b2p)
    else:
        kernel = _mlp_kernel_nodrop
        in_specs = [x_spec, w1_spec, b1_spec, w2_spec, b2_spec]
        args = (x2, w1p, b1p, w2p, b2p)

    out = pl.pallas_call(
        kernel,
        out_shape=jax.ShapeDtypeStruct((Mp, Np), x.dtype),
        grid=(n_m,),
        in_specs=in_specs,
        out_specs=out_spec,
        compiler_params=compiler_params,
        cost_estimate=cost,
    )(*args)

    return out[:M, :N].reshape(*lead, N)


def init_mlp_params(key, n_units, hidden=2048):
    """Deterministic init mirroring nn.Linear shapes (stored transposed)."""
    k1, k2, k3, k4 = jax.random.split(key, 4)
    lim1 = 1.0 / math.sqrt(n_units)
    lim2 = 1.0 / math.sqrt(hidden)
    w1 = jax.random.uniform(k1, (n_units, hidden), jnp.float32, -lim1, lim1)
    b1 = jax.random.uniform(k2, (hidden,), jnp.float32, -lim1, lim1)
    w2 = jax.random.uniform(k3, (hidden, n_units), jnp.float32, -lim2, lim2)
    b2 = jax.random.uniform(k4, (n_units,), jnp.float32, -lim2, lim2)
    return w1, b1, w2, b2


if __name__ == "__main__":
    key = jax.random.PRNGKey(0)
    k_x, k_p, k_drop = jax.random.split(key, 3)

    batch, seq, n_units = 2, 8, 32
    x = jax.random.normal(k_x, (batch, seq, n_units), jnp.float32)
    w1, b1, w2, b2 = init_mlp_params(k_p, n_units)

    # Correctness check with dropout disabled (deterministic path).
    out_nodrop = mlp_forward(x, w1, b1, w2, b2, dropout_p=0.0)
    out_nodrop = jax.block_until_ready(out_nodrop)
    ref = jnp.maximum(x @ w1 + b1, 0.0) @ w2 + b2
    assert out_nodrop.shape == (batch, seq, n_units)
    assert jnp.allclose(out_nodrop, ref, atol=1e-3, rtol=1e-3), \
        "mismatch vs reference"

    # Training-mode forward (dropout p=0.1, mask drawn with jax.random).
    # TODO(synk): dropout uses JAX's RNG stream, not torch's, so only
    # statistics (not per-element masks) match nn.Dropout.
    out = mlp_forward(x, w1, b1, w2, b2, dropout_p=0.1, rng_key=k_drop)
    out = jax.block_until_ready(out)
    assert out.shape == (batch, seq, n_units)
    assert bool(jnp.all(jnp.isfinite(out)))

    print("KERNEL_OK")
</pallas_src>

<mosaic_0001>
module attributes {stable_mosaic.version = 11 : i64} {
  func.func @_mlp_kernel_nodrop(%arg0: i32, %arg1: memref<16x128xf32, #tpu.memory_space<vmem>>, %arg2: memref<128x2048xf32, #tpu.memory_space<vmem>>, %arg3: memref<1x2048xf32, #tpu.memory_space<vmem>>, %arg4: memref<2048x128xf32, #tpu.memory_space<vmem>>, %arg5: memref<1x128xf32, #tpu.memory_space<vmem>>, %arg6: memref<16x128xf32, #tpu.memory_space<vmem>>) attributes {dimension_semantics = [#tpu.dimension_semantics<parallel>], iteration_bounds = array<i64: 1>, scalar_prefetch = 0 : i64, scratch_operands = 0 : i64, tpu.core_type = #tpu.core_type<tc>, window_params = [{transform_indices = @transform_0, window_bounds = array<i64: 16, 128>}, {pipeline_mode = #tpu.pipeline_mode<synchronous>, transform_indices = @transform_1, window_bounds = array<i64: 128, 2048>}, {pipeline_mode = #tpu.pipeline_mode<synchronous>, transform_indices = @transform_2, window_bounds = array<i64: 1, 2048>}, {pipeline_mode = #tpu.pipeline_mode<synchronous>, transform_indices = @transform_3, window_bounds = array<i64: 2048, 128>}, {pipeline_mode = #tpu.pipeline_mode<synchronous>, transform_indices = @transform_4, window_bounds = array<i64: 1, 128>}, {transform_indices = @transform_5, window_bounds = array<i64: 16, 128>}]} {
    %c0 = arith.constant 0 : index
    %c0_0 = arith.constant 0 : index
    %0 = vector.load %arg1[%c0, %c0_0] : memref<16x128xf32, #tpu.memory_space<vmem>>, vector<16x128xf32>
    %c0_1 = arith.constant 0 : index
    %c0_2 = arith.constant 0 : index
    %1 = vector.load %arg2[%c0_1, %c0_2] : memref<128x2048xf32, #tpu.memory_space<vmem>>, vector<128x2048xf32>
    %cst = arith.constant dense<0.000000e+00> : vector<16x2048xf32>
    %2 = tpu.matmul %0, %1, %cst {dimension_numbers = #tpu.dot_dimension_numbers<[1], [0], [0], [1], [0, 0, 1, 1], [], []>} : vector<16x128xf32>, vector<128x2048xf32>, vector<16x2048xf32> -> vector<16x2048xf32>
    %c0_3 = arith.constant 0 : index
    %c0_4 = arith.constant 0 : index
    %3 = vector.load %arg3[%c0_3, %c0_4] : memref<1x2048xf32, #tpu.memory_space<vmem>>, vector<1x2048xf32>
    %4 = vector.broadcast %3 : vector<1x2048xf32> to vector<16x2048xf32>
    %5 = arith.addf %2, %4 : vector<16x2048xf32>
    %cst_5 = arith.constant 0.000000e+00 : f32
    %6 = vector.broadcast %cst_5 : f32 to vector<16x2048xf32>
    %7 = arith.maximumf %5, %6 : vector<16x2048xf32>
    %c0_6 = arith.constant 0 : index
    %c0_7 = arith.constant 0 : index
    %8 = vector.load %arg4[%c0_6, %c0_7] : memref<2048x128xf32, #tpu.memory_space<vmem>>, vector<2048x128xf32>
    %cst_8 = arith.constant dense<0.000000e+00> : vector<16x128xf32>
    %9 = tpu.matmul %7, %8, %cst_8 {dimension_numbers = #tpu.dot_dimension_numbers<[1], [0], [0], [1], [0, 0, 1, 1], [], []>} : vector<16x2048xf32>, vector<2048x128xf32>, vector<16x128xf32> -> vector<16x128xf32>
    %c0_9 = arith.constant 0 : index
    %c0_10 = arith.constant 0 : index
    %10 = vector.load %arg5[%c0_9, %c0_10] : memref<1x128xf32, #tpu.memory_space<vmem>>, vector<1x128xf32>
    %11 = vector.broadcast %10 : vector<1x128xf32> to vector<16x128xf32>
    %12 = arith.addf %9, %11 : vector<16x128xf32>
    %c0_11 = arith.constant 0 : index
    %c0_12 = arith.constant 0 : index
    %13 = vector.load %arg6[%c0_11, %c0_12] : memref<16x128xf32, #tpu.memory_space<vmem>>, vector<16x128xf32>
    tpu.vector_store %arg6[%c0_11, %c0_12], %12 {strides = array<i32>} : memref<16x128xf32, #tpu.memory_space<vmem>>, vector<16x128xf32>,
    return
  }
  func.func @transform_0(%arg0: i32) -> (i32, i32) {
    %c0_i32 = arith.constant 0 : i32
    %c0_i32_0 = arith.constant 0 : i32
    return %arg0, %c0_i32 : i32, i32
  }
  func.func @transform_1(%arg0: i32) -> (i32, i32) {
    %c0_i32 = arith.constant 0 : i32
    %c0_i32_0 = arith.constant 0 : i32
    %c0_i32_1 = arith.constant 0 : i32
    return %c0_i32, %c0_i32_0 : i32, i32
  }
  func.func @transform_2(%arg0: i32) -> (i32, i32) {
    %c0_i32 = arith.constant 0 : i32
    %c0_i32_0 = arith.constant 0 : i32
    %c0_i32_1 = arith.constant 0 : i32
    return %c0_i32, %c0_i32_0 : i32, i32
  }
  func.func @transform_3(%arg0: i32) -> (i32, i32) {
    %c0_i32 = arith.constant 0 : i32
    %c0_i32_0 = arith.constant 0 : i32
    %c0_i32_1 = arith.constant 0 : i32
    return %c0_i32, %c0_i32_0 : i32, i32
  }
  func.func @transform_4(%arg0: i32) -> (i32, i32) {
    %c0_i32 = arith.constant 0 : i32
    %c0_i32_0 = arith.constant 0 : i32
    %c0_i32_1 = arith.constant 0 : i32
    return %c0_i32, %c0_i32_0 : i32, i32
  }
  func.func @transform_5(%arg0: i32) -> (i32, i32) {
    %c0_i32 = arith.constant 0 : i32
    %c0_i32_0 = arith.constant 0 : i32
    return %arg0, %c0_i32 : i32, i32
  }
}

</mosaic_0001>

<llo_original>
// kernel: tpu_custom_call.1
$region0: #{tpu_custom_call.1}
  #allocation0 [shape = 'u32[]', space=smem, size = 0x4, offset = 0x4, fixed_abs, tag = 'smem constant byte address 0x4 - core index']
  #allocation1 [shape = 'u32[72,128]{1,0:T(1,128)}', space=vmem, size = 0x9000, scoped, tag = 'internal scratch']
  %s0 = inlined_call_operand.hbm [shape: f32[16,128], index: 0, kind: input, shape index: {}]
  %s1 = inlined_call_operand.hbm [shape: f32[128,2048], index: 1, kind: input, shape index: {}]
  %s2 = inlined_call_operand.hbm [shape: f32[1,2048], index: 2, kind: input, shape index: {}]
  %s3 = inlined_call_operand.hbm [shape: f32[2048,128], index: 3, kind: input, shape index: {}]
  %s4 = inlined_call_operand.vmem [shape: f32[1,128], index: 4, kind: input, shape index: {}]
  %s5 = inlined_call_operand.hbm [shape: f32[16,128], index: 5, kind: output, shape index: {}]
  %s6 = sld [smem:[#allocation0]]
  $region46: #{tpu_custom_call.1} parent=0
    _
  %s8 = ssub.s32 1, %s6
  %s9 = scalar_select 0, %s8, %s6
  $region1: #{tpu_custom_call.1} parent=0
    #allocation2 [shape = 'u8[8192]{0}', space=vmem, size = 0x2000, scoped, tag = 'input window, operand 0, single buffered']
    #allocation3 [shape = 's32[1]{0}', space=sflag, size = 0x4, scoped, tag = 'scoped memory for tpu_custom_call.1']
    #allocation4 [shape = 's32[1]{0}', space=sflag, size = 0x4, scoped, tag = 'scoped memory for tpu_custom_call.1']
    #allocation5 [shape = 'u8[1048576]{0}', space=vmem, size = 0x100000, scoped, tag = 'input window, operand 1, single buffered']
    #allocation6 [shape = 's32[1]{0}', space=sflag, size = 0x4, scoped, tag = 'scoped memory for tpu_custom_call.1']
    #allocation7 [shape = 'u8[8192]{0}', space=vmem, size = 0x2000, scoped, tag = 'input window, operand 2, single buffered']
    #allocation8 [shape = 'u8[1048576]{0}', space=vmem, size = 0x100000, scoped, tag = 'input window, operand 3, single buffered']
    #allocation9 [shape = 's32[1]{0}', space=sflag, size = 0x4, scoped, tag = 'scoped memory for tpu_custom_call.1']
    #allocation10 [shape = 'u8[8192]{0}', space=vmem, size = 0x2000, scoped, tag = 'output window, operand 0, single buffered']
    %10 = vsyncpa [#allocation3], 0
    %11 = vsyncpa [#allocation6], 0
    %12 = vsyncpa [#allocation9], 0
    %13 = vsyncpa [#allocation4], 0
    // Predicated region
    $region2: #{tpu_custom_call.1} parent=1 // pred_check
      _
    $region3: #{tpu_custom_call.1} parent=1 // pred_check_branch
      %15 = sbr.rel (0) target = $region5
    $region4: #{tpu_custom_call.1} parent=1 // pred_region
      %17 = vsyncadd [#allocation3], 0
      %s18 = sshll.u32 %s0, 4
      %s19 = int_to_ptr.hbm [resolvable:$true] %s18
      %s20 = sshll.u32 [#allocation2], 4
      %s21 = int_to_ptr.vmem [resolvable:$true] %s20
      %26 = dma.hbm_to_vmem [thread:$0]  %s19, 256, %s21, [#allocation3], 128, 128, 8
    $region5: #{tpu_custom_call.1} parent=1 // pred_fallthru
      _
    // Predicated region
    $region6: #{tpu_custom_call.1} parent=1 // pred_check
      _
    $region7: #{tpu_custom_call.1} parent=1 // pred_check_branch
      %28 = sbr.rel (0) target = $region9
    $region8: #{tpu_custom_call.1} parent=1 // pred_region
      %30 = vsyncadd [#allocation6], 0
      %s31 = sshll.u32 %s1, 4
      %s32 = int_to_ptr.hbm [resolvable:$true] %s31
      %s33 = sshll.u32 [#allocation5], 4
      %s34 = int_to_ptr.vmem [resolvable:$true] %s33
      %39 = dma.hbm_to_vmem [thread:$0]  %s32, 32768, %s34, [#allocation6], 2048, 2048, 128
    $region9: #{tpu_custom_call.1} parent=1 // pred_fallthru
      _
    // Predicated region
    $region10: #{tpu_custom_call.1} parent=1 // pred_check
      _
    $region11: #{tpu_custom_call.1} parent=1 // pred_check_branch
      %41 = sbr.rel (0) target = $region13
    $region12: #{tpu_custom_call.1} parent=1 // pred_region
      %43 = vsyncadd [#allocation6], 0
      %s45 = sshll.u32 %s2, 4
      %s46 = int_to_ptr.hbm [resolvable:$true] %s45
      %s47 = sshll.u32 [#allocation7], 4
      %s48 = int_to_ptr.vmem [resolvable:$true] %s47
      %50 = dma.hbm_to_vmem [thread:$0]  %s46, 256, %s48, [#allocation6]
    $region13: #{tpu_custom_call.1} parent=1 // pred_fallthru
      _
    // Predicated region
    $region14: #{tpu_custom_call.1} parent=1 // pred_check
      _
    $region15: #{tpu_custom_call.1} parent=1 // pred_check_branch
      %52 = sbr.rel (0) target = $region17
    $region16: #{tpu_custom_call.1} parent=1 // pred_region
      %54 = vsyncadd [#allocation9], 0
      %s55 = sshll.u32 %s3, 4
      %s56 = int_to_ptr.hbm [resolvable:$true] %s55
      %s57 = sshll.u32 [#allocation8], 4
      %s58 = int_to_ptr.vmem [resolvable:$true] %s57
      %63 = dma.hbm_to_vmem [thread:$0]  %s56, 32768, %s58, [#allocation9], 128, 128, 8
    $region17: #{tpu_custom_call.1} parent=1 // pred_fallthru
      _
    // Predicated region
    $region18: #{tpu_custom_call.1} parent=1 // pred_check
      _
    $region19: #{tpu_custom_call.1} parent=1 // pred_check_branch
      %65 = sbr.rel (0) target = $region21
    $region20: #{tpu_custom_call.1} parent=1 // pred_region
      _
    $region21: #{tpu_custom_call.1} parent=1 // pred_fallthru
      _
    // Predicated region
    $region22: #{tpu_custom_call.1} parent=1 // pred_check
      _
    $region23: #{tpu_custom_call.1} parent=1 // pred_check_branch
      %67 = sbr.rel (0) target = $region25
    $region24: #{tpu_custom_call.1} parent=1 // pred_region
      %69 = dma.done [#allocation3], 256
    $region25: #{tpu_custom_call.1} parent=1 // pred_fallthru
      _
    // Predicated region
    $region26: #{tpu_custom_call.1} parent=1 // pred_check
      _
    $region27: #{tpu_custom_call.1} parent=1 // pred_check_branch
      %71 = sbr.rel (0) target = $region29
    $region28: #{tpu_custom_call.1} parent=1 // pred_region
      %73 = dma.done [#allocation6], 32768
    $region29: #{tpu_custom_call.1} parent=1 // pred_fallthru
      _
    // Predicated region
    $region30: #{tpu_custom_call.1} parent=1 // pred_check
      _
    $region31: #{tpu_custom_call.1} parent=1 // pred_check_branch
      %75 = sbr.rel (0) target = $region33
    $region32: #{tpu_custom_call.1} parent=1 // pred_region
      %77 = dma.done [#allocation6], 256
    $region33: #{tpu_custom_call.1} parent=1 // pred_fallthru
      _
    // Predicated region
    $region34: #{tpu_custom_call.1} parent=1 // pred_check
      _
    $region35: #{tpu_custom_call.1} parent=1 // pred_check_branch
      %79 = sbr.rel (0) target = $region37
    $region36: #{tpu_custom_call.1} parent=1 // pred_region
      %81 = dma.done [#allocation9], 32768
    $region37: #{tpu_custom_call.1} parent=1 // pred_fallthru
      _
    %v82 = vld [vmem:[#allocation2] sm:$0xff]
    %v83 = vld [vmem:[#allocation2 + $0x8] sm:$0xff]
    %v84 = vld [vmem:[#allocation5] sm:$0xff]
    %v85 = vld [vmem:[#allocation5 + $0x8] sm:$0xff]
    %v86 = vld [vmem:[#allocation5 + $0x10] sm:$0xff]
    %v87 = vld [vmem:[#allocation5 + $0x18] sm:$0xff]
    %v88 = vld [vmem:[#allocation5 + $0x20] sm:$0xff]
    %v89 = vld [vmem:[#allocation5 + $0x28] sm:$0xff]
    %v90 = vld [vmem:[#allocation5 + $0x30] sm:$0xff]
    %v91 = vld [vmem:[#allocation5 + $0x38] sm:$0xff]
    %v92 = vld [vmem:[#allocation5 + $0x40] sm:$0xff]
    %v93 = vld [vmem:[#allocation5 + $0x48] sm:$0xff]
    %v94 = vld [vmem:[#allocation5 + $0x50] sm:$0xff]
    %v95 = vld [vmem:[#allocation5 + $0x58] sm:$0xff]
    %v96 = vld [vmem:[#allocation5 + $0x60] sm:$0xff]
    %v97 = vld [vmem:[#allocation5 + $0x68] sm:$0xff]
    %v98 = vld [vmem:[#allocation5 + $0x70] sm:$0xff]
    %v99 = vld [vmem:[#allocation5 + $0x78] sm:$0xff]
    %v100 = vld [vmem:[#allocation5 + $0x80] sm:$0xff]
    %v101 = vld [vmem:[#allocation5 + $0x88] sm:$0xff]
    %v102 = vld [vmem:[#allocation5 + $0x90] sm:$0xff]
    %v103 = vld [vmem:[#allocation5 + $0x98] sm:$0xff]
    %v104 = vld [vmem:[#allocation5 + $0xa0] sm:$0xff]
    %v105 = vld [vmem:[#allocation5 + $0xa8] sm:$0xff]
    %v106 = vld [vmem:[#allocation5 + $0xb0] sm:$0xff]
    %v107 = vld [vmem:[#allocation5 + $0xb8] sm:$0xff]
    %v108 = vld [vmem:[#allocation5 + $0xc0] sm:$0xff]
    %v109 = vld [vmem:[#allocation5 + $0xc8] sm:$0xff]
    %v110 = vld [vmem:[#allocation5 + $0xd0] sm:$0xff]
    %v111 = vld [vmem:[#allocation5 + $0xd8] sm:$0xff]
    %v112 = vld [vmem:[#allocation5 + $0xe0] sm:$0xff]
    %v113 = vld [vmem:[#allocation5 + $0xe8] sm:$0xff]
    %v114 = vld [vmem:[#allocation5 + $0xf0] sm:$0xff]
    %v115 = vld [vmem:[#allocation5 + $0xf8] sm:$0xff]
    %v116 = vld [vmem:[#allocation5 + $0x100] sm:$0xff]
    %v117 = vld [vmem:[#allocation5 + $0x108] sm:$0xff]
    %v118 = vld [vmem:[#allocation5 + $0x110] sm:$0xff]
    %v119 = vld [vmem:[#allocation5 + $0x118] sm:$0xff]
    %v120 = vld [vmem:[#allocation5 + $0x120] sm:$0xff]
    %v121 = vld [vmem:[#allocation5 + $0x128] sm:$0xff]
    %v122 = vld [vmem:[#allocation5 + $0x130] sm:$0xff]
    %v123 = vld [vmem:[#allocation5 + $0x138] sm:$0xff]
    %v124 = vld [vmem:[#allocation5 + $0x140] sm:$0xff]
    %v125 = vld [vmem:[#allocation5 + $0x148] sm:$0xff]
    %v126 = vld [vmem:[#allocation5 + $0x150] sm:$0xff]
    %v127 = vld [vmem:[#allocation5 + $0x158] sm:$0xff]
    %v128 = vld [vmem:[#allocation5 + $0x160] sm:$0xff]
    %v129 = vld [vmem:[#allocation5 + $0x168] sm:$0xff]
    %v130 = vld [vmem:[#allocation5 + $0x170] sm:$0xff]
    %v131 = vld [vmem:[#allocation5 + $0x178] sm:$0xff]
    %v132 = vld [vmem:[#allocation5 + $0x180] sm:$0xff]
    %v133 = vld [vmem:[#allocation5 + $0x188] sm:$0xff]
    %v134 = vld [vmem:[#allocation5 + $0x190] sm:$0xff]
    %v135 = vld [vmem:[#allocation5 + $0x198] sm:$0xff]
    %v136 = vld [vmem:[#allocation5 + $0x1a0] sm:$0xff]
    %v137 = vld [vmem:[#allocation5 + $0x1a8] sm:$0xff]
    %v138 = vld [vmem:[#allocation5 + $0x1b0] sm:$0xff]
    %v139 = vld [vmem:[#allocation5 + $0x1b8] sm:$0xff]
    %v140 = vld [vmem:[#allocation5 + $0x1c0] sm:$0xff]
    %v141 = vld [vmem:[#allocation5 + $0x1c8] sm:$0xff]
    %v142 = vld [vmem:[#allocation5 + $0x1d0] sm:$0xff]
    %v143 = vld [vmem:[#allocation5 + $0x1d8] sm:$0xff]
    %v144 = vld [vmem:[#allocation5 + $0x1e0] sm:$0xff]
    %v145 = vld [vmem:[#allocation5 + $0x1e8] sm:$0xff]
    %v146 = vld [vmem:[#allocation5 + $0x1f0] sm:$0xff]
    %v147 = vld [vmem:[#allocation5 + $0x1f8] sm:$0xff]
    %v148 = vld [vmem:[#allocation5 + $0x200] sm:$0xff]
    %v149 = vld [vmem:[#allocation5 + $0x208] sm:$0xff]
    %v150 = vld [vmem:[#allocation5 + $0x210] sm:$0xff]
    %v151 = vld [vmem:[#allocation5 + $0x218] sm:$0xff]
    %v152 = vld [vmem:[#allocation5 + $0x220] sm:$0xff]
    %v153 = vld [vmem:[#allocation5 + $0x228] sm:$0xff]
    %v154 = vld [vmem:[#allocation5 + $0x230] sm:$0xff]
    %v155 = vld [vmem:[#allocation5 + $0x238] sm:$0xff]
    %v156 = vld [vmem:[#allocation5 + $0x240] sm:$0xff]
    %v157 = vld [vmem:[#allocation5 + $0x248] sm:$0xff]
    %v158 = vld [vmem:[#allocation5 + $0x250] sm:$0xff]
    %v159 = vld [vmem:[#allocation5 + $0x258] sm:$0xff]
    %v160 = vld [vmem:[#allocation5 + $0x260] sm:$0xff]
    %v161 = vld [vmem:[#allocation5 + $0x268] sm:$0xff]
    %v162 = vld [vmem:[#allocation5 + $0x270] sm:$0xff]
    %v163 = vld [vmem:[#allocation5 + $0x278] sm:$0xff]
    %v164 = vld [vmem:[#allocation5 + $0x280] sm:$0xff]
    %v165 = vld [vmem:[#allocation5 + $0x288] sm:$0xff]
    %v166 = vld [vmem:[#allocation5 + $0x290] sm:$0xff]
    %v167 = vld [vmem:[#allocation5 + $0x298] sm:$0xff]
    %v168 = vld [vmem:[#allocation5 + $0x2a0] sm:$0xff]
    %v169 = vld [vmem:[#allocation5 + $0x2a8] sm:$0xff]
    %v170 = vld [vmem:[#allocation5 + $0x2b0] sm:$0xff]
    %v171 = vld [vmem:[#allocation5 + $0x2b8] sm:$0xff]
    %v172 = vld [vmem:[#allocation5 + $0x2c0] sm:$0xff]
    %v173 = vld [vmem:[#allocation5 + $0x2c8] sm:$0xff]
    %v174 = vld [vmem:[#allocation5 + $0x2d0] sm:$0xff]
    %v175 = vld [vmem:[#allocation5 + $0x2d8] sm:$0xff]
    %v176 = vld [vmem:[#allocation5 + $0x2e0] sm:$0xff]
    %v177 = vld [vmem:[#allocation5 + $0x2e8] sm:$0xff]
    %v178 = vld [vmem:[#allocation5 + $0x2f0] sm:$0xff]
    %v179 = vld [vmem:[#allocation5 + $0x2f8] sm:$0xff]
    %v180 = vld [vmem:[#allocation5 + $0x300] sm:$0xff]
    %v181 = vld [vmem:[#allocation5 + $0x308] sm:$0xff]
    %v182 = vld [vmem:[#allocation5 + $0x310] sm:$0xff]
    %v183 = vld [vmem:[#allocation5 + $0x318] sm:$0xff]
    %v184 = vld [vmem:[#allocation5 + $0x320] sm:$0xff]
    %v185 = vld [vmem:[#allocation5 + $0x328] sm:$0xff]
    %v186 = vld [vmem:[#allocation5 + $0x330] sm:$0xff]
    %v187 = vld [vmem:[#allocation5 + $0x338] sm:$0xff]
    %v188 = vld [vmem:[#allocation5 + $0x340] sm:$0xff]
    %v189 = vld [vmem:[#allocation5 + $0x348] sm:$0xff]
    %v190 = vld [vmem:[#allocation5 + $0x350] sm:$0xff]
    %v191 = vld [vmem:[#allocation5 + $0x358] sm:$0xff]
    %v192 = vld [vmem:[#allocation5 + $0x360] sm:$0xff]
    %v193 = vld [vmem:[#allocation5 + $0x368] sm:$0xff]
    %v194 = vld [vmem:[#allocation5 + $0x370] sm:$0xff]
    %v195 = vld [vmem:[#allocation5 + $0x378] sm:$0xff]
    %v196 = vld [vmem:[#allocation5 + $0x380] sm:$0xff]
    %v197 = vld [vmem:[#allocation5 + $0x388] sm:$0xff]
    %v198 = vld [vmem:[#allocation5 + $0x390] sm:$0xff]
    %v199 = vld [vmem:[#allocation5 + $0x398] sm:$0xff]
    %v200 = vld [vmem:[#allocation5 + $0x3a0] sm:$0xff]
    %v201 = vld [vmem:[#allocation5 + $0x3a8] sm:$0xff]
    %v202 = vld [vmem:[#allocation5 + $0x3b0] sm:$0xff]
    %v203 = vld [vmem:[#allocation5 + $0x3b8] sm:$0xff]
    %v204 = vld [vmem:[#allocation5 + $0x3c0] sm:$0xff]
    %v205 = vld [vmem:[#allocation5 + $0x3c8] sm:$0xff]
    %v206 = vld [vmem:[#allocation5 + $0x3d0] sm:$0xff]
    %v207 = vld [vmem:[#allocation5 + $0x3d8] sm:$0xff]
    %v208 = vld [vmem:[#allocation5 + $0x3e0] sm:$0xff]
    %v209 = vld [vmem:[#allocation5 + $0x3e8] sm:$0xff]
    %v210 = vld [vmem:[#allocation5 + $0x3f0] sm:$0xff]
    %v211 = vld [vmem:[#allocation5 + $0x3f8] sm:$0xff]
    %v212 = vld [vmem:[#allocation5 + $0x400] sm:$0xff]
    %v213 = vld [vmem:[#allocation5 + $0x408] sm:$0xff]
    %v214 = vld [vmem:[#allocation5 + $0x410] sm:$0xff]
    %v215 = vld [vmem:[#allocation5 + $0x418] sm:$0xff]
    %v216 = vld [vmem:[#allocation5 + $0x420] sm:$0xff]
    %v217 = vld [vmem:[#allocation5 + $0x428] sm:$0xff]
    %v218 = vld [vmem:[#allocation5 + $0x430] sm:$0xff]
    %v219 = vld [vmem:[#allocation5 + $0x438] sm:$0xff]
    %v220 = vld [vmem:[#allocation5 + $0x440] sm:$0xff]
    %v221 = vld [vmem:[#allocation5 + $0x448] sm:$0xff]
    %v222 = vld [vmem:[#allocation5 + $0x450] sm:$0xff]
    %v223 = vld [vmem:[#allocation5 + $0x458] sm:$0xff]
    %v224 = vld [vmem:[#allocation5 + $0x460] sm:$0xff]
    %v225 = vld [vmem:[#allocation5 + $0x468] sm:$0xff]
    %v226 = vld [vmem:[#allocation5 + $0x470] sm:$0xff]
    %v227 = vld [vmem:[#allocation5 + $0x478] sm:$0xff]
    %v228 = vld [vmem:[#allocation5 + $0x480] sm:$0xff]
    %v229 = vld [vmem:[#allocation5 + $0x488] sm:$0xff]
    %v230 = vld [vmem:[#allocation5 + $0x490] sm:$0xff]
    %v231 = vld [vmem:[#allocation5 + $0x498] sm:$0xff]
    %v232 = vld [vmem:[#allocation5 + $0x4a0] sm:$0xff]
    %v233 = vld [vmem:[#allocation5 + $0x4a8] sm:$0xff]
    %v234 = vld [vmem:[#allocation5 + $0x4b0] sm:$0xff]
    %v235 = vld [vmem:[#allocation5 + $0x4b8] sm:$0xff]
    %v236 = vld [vmem:[#allocation5 + $0x4c0] sm:$0xff]
    %v237 = vld [vmem:[#allocation5 + $0x4c8] sm:$0xff]
    %v238 = vld [vmem:[#allocation5 + $0x4d0] sm:$0xff]
    %v239 = vld [vmem:[#allocation5 + $0x4d8] sm:$0xff]
    %v240 = vld [vmem:[#allocation5 + $0x4e0] sm:$0xff]
    %v241 = vld [vmem:[#allocation5 + $0x4e8] sm:$0xff]
    %v242 = vld [vmem:[#allocation5 + $0x4f0] sm:$0xff]
    %v243 = vld [vmem:[#allocation5 + $0x4f8] sm:$0xff]
    %v244 = vld [vmem:[#allocation5 + $0x500] sm:$0xff]
    %v245 = vld [vmem:[#allocation5 + $0x508] sm:$0xff]
    %v246 = vld [vmem:[#allocation5 + $0x510] sm:$0xff]
    %v247 = vld [vmem:[#allocation5 + $0x518] sm:$0xff]
    %v248 = vld [vmem:[#allocation5 + $0x520] sm:$0xff]
    %v249 = vld [vmem:[#allocation5 + $0x528] sm:$0xff]
    %v250 = vld [vmem:[#allocation5 + $0x530] sm:$0xff]
    %v251 = vld [vmem:[#allocation5 + $0x538] sm:$0xff]
    %v252 = vld [vmem:[#allocation5 + $0x540] sm:$0xff]
    %v253 = vld [vmem:[#allocation5 + $0x548] sm:$0xff]
    %v254 = vld [vmem:[#allocation5 + $0x550] sm:$0xff]
    %v255 = vld [vmem:[#allocation5 + $0x558] sm:$0xff]
    %v256 = vld [vmem:[#allocation5 + $0x560] sm:$0xff]
    %v257 = vld [vmem:[#allocation5 + $0x568] sm:$0xff]
    %v258 = vld [vmem:[#allocation5 + $0x570] sm:$0xff]
    %v259 = vld [vmem:[#allocation5 + $0x578] sm:$0xff]
    %v260 = vld [vmem:[#allocation5 + $0x580] sm:$0xff]
    %v261 = vld [vmem:[#allocation5 + $0x588] sm:$0xff]
    %v262 = vld [vmem:[#allocation5 + $0x590] sm:$0xff]
    %v263 = vld [vmem:[#allocation5 + $0x598] sm:$0xff]
    %v264 = vld [vmem:[#allocation5 + $0x5a0] sm:$0xff]
    %v265 = vld [vmem:[#allocation5 + $0x5a8] sm:$0xff]
    %v266 = vld [vmem:[#allocation5 + $0x5b0] sm:$0xff]
    %v267 = vld [vmem:[#allocation5 + $0x5b8] sm:$0xff]
    %v268 = vld [vmem:[#allocation5 + $0x5c0] sm:$0xff]
    %v269 = vld [vmem:[#allocation5 + $0x5c8] sm:$0xff]
    %v270 = vld [vmem:[#allocation5 + $0x5d0] sm:$0xff]
    %v271 = vld [vmem:[#allocation5 + $0x5d8] sm:$0xff]
    %v272 = vld [vmem:[#allocation5 + $0x5e0] sm:$0xff]
    %v273 = vld [vmem:[#allocation5 + $0x5e8] sm:$0xff]
    %v274 = vld [vmem:[#allocation5 + $0x5f0] sm:$0xff]
    %v275 = vld [vmem:[#allocation5 + $0x5f8] sm:$0xff]
    %v276 = vld [vmem:[#allocation5 + $0x600] sm:$0xff]
    %v277 = vld [vmem:[#allocation5 + $0x608] sm:$0xff]
    %v278 = vld [vmem:[#allocation5 + $0x610] sm:$0xff]
    %v279 = vld [vmem:[#allocation5 + $0x618] sm:$0xff]
    %v280 = vld [vmem:[#allocation5 + $0x620] sm:$0xff]
    %v281 = vld [vmem:[#allocation5 + $0x628] sm:$0xff]
    %v282 = vld [vmem:[#allocation5 + $0x630] sm:$0xff]
    %v283 = vld [vmem:[#allocation5 + $0x638] sm:$0xff]
    %v284 = vld [vmem:[#allocation5 + $0x640] sm:$0xff]
    %v285 = vld [vmem:[#allocation5 + $0x648] sm:$0xff]
    %v286 = vld [vmem:[#allocation5 + $0x650] sm:$0xff]
    %v287 = vld [vmem:[#allocation5 + $0x658] sm:$0xff]
    %v288 = vld [vmem:[#allocation5 + $0x660] sm:$0xff]
    %v289 = vld [vmem:[#allocation5 + $0x668] sm:$0xff]
    %v290 = vld [vmem:[#allocation5 + $0x670] sm:$0xff]
    %v291 = vld [vmem:[#allocation5 + $0x678] sm:$0xff]
    %v292 = vld [vmem:[#allocation5 + $0x680] sm:$0xff]
    %v293 = vld [vmem:[#allocation5 + $0x688] sm:$0xff]
    %v294 = vld [vmem:[#allocation5 + $0x690] sm:$0xff]
    %v295 = vld [vmem:[#allocation5 + $0x698] sm:$0xff]
    %v296 = vld [vmem:[#allocation5 + $0x6a0] sm:$0xff]
    %v297 = vld [vmem:[#allocation5 + $0x6a8] sm:$0xff]
    %v298 = vld [vmem:[#allocation5 + $0x6b0] sm:$0xff]
    %v299 = vld [vmem:[#allocation5 + $0x6b8] sm:$0xff]
    %v300 = vld [vmem:[#allocation5 + $0x6c0] sm:$0xff]
    %v301 = vld [vmem:[#allocation5 + $0x6c8] sm:$0xff]
    %v302 = vld [vmem:[#allocation5 + $0x6d0] sm:$0xff]
    %v303 = vld [vmem:[#allocation5 + $0x6d8] sm:$0xff]
    %v304 = vld [vmem:[#allocation5 + $0x6e0] sm:$0xff]
    %v305 = vld [vmem:[#allocation5 + $0x6e8] sm:$0xff]
    %v306 = vld [vmem:[#allocation5 + $0x6f0] sm:$0xff]
    %v307 = vld [vmem:[#allocation5 + $0x6f8] sm:$0xff]
    %v308 = vld [vmem:[#allocation5 + $0x700] sm:$0xff]
    %v309 = vld [vmem:[#allocation5 + $0x708] sm:$0xff]
    %v310 = vld [vmem:[#allocation5 + $0x710] sm:$0xff]
    %v311 = vld [vmem:[#allocation5 + $0x718] sm:$0xff]
    %v312 = vld [vmem:[#allocation5 + $0x720] sm:$0xff]
    %v313 = vld [vmem:[#allocation5 + $0x728] sm:$0xff]
    %v314 = vld [vmem:[#allocation5 + $0x730] sm:$0xff]
    %v315 = vld [vmem:[#allocation5 + $0x738] sm:$0xff]
    %v316 = vld [vmem:[#allocation5 + $0x740] sm:$0xff]
    %v317 = vld [vmem:[#allocation5 + $0x748] sm:$0xff]
    %v318 = vld [vmem:[#allocation5 + $0x750] sm:$0xff]
    %v319 = vld [vmem:[#allocation5 + $0x758] sm:$0xff]
    %v320 = vld [vmem:[#allocation5 + $0x760] sm:$0xff]
    %v321 = vld [vmem:[#allocation5 + $0x768] sm:$0xff]
    %v322 = vld [vmem:[#allocation5 + $0x770] sm:$0xff]
    %v323 = vld [vmem:[#allocation5 + $0x778] sm:$0xff]
    %v324 = vld [vmem:[#allocation5 + $0x780] sm:$0xff]
    %v325 = vld [vmem:[#allocation5 + $0x788] sm:$0xff]
    %v326 = vld [vmem:[#allocation5 + $0x790] sm:$0xff]
    %v327 = vld [vmem:[#allocation5 + $0x798] sm:$0xff]
    %v328 = vld [vmem:[#allocation5 + $0x7a0] sm:$0xff]
    %v329 = vld [vmem:[#allocation5 + $0x7a8] sm:$0xff]
    %v330 = vld [vmem:[#allocation5 + $0x7b0] sm:$0xff]
    %v331 = vld [vmem:[#allocation5 + $0x7b8] sm:$0xff]
    %v332 = vld [vmem:[#allocation5 + $0x7c0] sm:$0xff]
    %v333 = vld [vmem:[#allocation5 + $0x7c8] sm:$0xff]
    %v334 = vld [vmem:[#allocation5 + $0x7d0] sm:$0xff]
    %v335 = vld [vmem:[#allocation5 + $0x7d8] sm:$0xff]
    %v336 = vld [vmem:[#allocation5 + $0x7e0] sm:$0xff]
    %v337 = vld [vmem:[#allocation5 + $0x7e8] sm:$0xff]
    %v338 = vld [vmem:[#allocation5 + $0x7f0] sm:$0xff]
    %v339 = vld [vmem:[#allocation5 + $0x7f8] sm:$0xff]
    %v340 = vld [vmem:[#allocation7] sm:$0xff]
    %v341 = vld [vmem:[#allocation7 + $0x8] sm:$0xff]
    %v344 = vperm.slane %v340, 0
    %v345 = vperm.slane %v340, 1
    %v346 = vperm.slane %v340, 2
    %v347 = vperm.slane %v340, 3
    %v348 = vperm.slane %v340, 4
    %v349 = vperm.slane %v340, 5
    %v350 = vperm.slane %v340, 6
    %v351 = vperm.slane %v340, 7
    %v352 = vperm.slane %v341, 0
    %v353 = vperm.slane %v341, 1
    %v354 = vperm.slane %v341, 2
    %v355 = vperm.slane %v341, 3
    %v356 = vperm.slane %v341, 4
    %v357 = vperm.slane %v341, 5
    %v358 = vperm.slane %v341, 6
    %v359 = vperm.slane %v341, 7
    %376 = vmatpush.msra.mxu0 %v324
    %377 = vmatpush.msra.mxu0 %v308
    %378 = vmatpush.msra.mxu0 %v292
    %379 = vmatpush.msra.mxu0 %v276
    %380 = vmatpush.msra.mxu0 %v260
    %381 = vmatpush.msra.mxu0 %v244
    %382 = vmatpush.msra.mxu0 %v228
    %383 = vmatpush.msra.mxu0 %v212
    %384 = vmatpush.msra.mxu0 %v196
    %385 = vmatpush.msra.mxu0 %v180
    %386 = vmatpush.msra.mxu0 %v164
    %387 = vmatpush.msra.mxu0 %v148
    %388 = vmatpush.msra.mxu0 %v132
    %389 = vmatpush.msra.mxu0 %v116
    %390 = vmatpush.msra.mxu0 %v100
    %391 = vmatpush.msra.mxu0 %v84
    %392 = vmatmul.f32.gmra.mxu0 %v82
    %v393 = vpop.f32.mrf.mxu0
    %v394 = vadd.f32 %v344, %v393
    %395 = vmatmul.f32.gmra.mxu0 %v83
    %v396 = vpop.f32.mrf.mxu0
    %v397 = vadd.f32 %v344, %v396
    %398 = vdwg.mxu0
    %399 = vmatpush.msra.mxu0 %v325
    %400 = vmatpush.msra.mxu0 %v309
    %401 = vmatpush.msra.mxu0 %v293
    %402 = vmatpush.msra.mxu0 %v277
    %403 = vmatpush.msra.mxu0 %v261
    %404 = vmatpush.msra.mxu0 %v245
    %405 = vmatpush.msra.mxu0 %v229
    %406 = vmatpush.msra.mxu0 %v213
    %407 = vmatpush.msra.mxu0 %v197
    %408 = vmatpush.msra.mxu0 %v181
    %409 = vmatpush.msra.mxu0 %v165
    %410 = vmatpush.msra.mxu0 %v149
    %411 = vmatpush.msra.mxu0 %v133
    %412 = vmatpush.msra.mxu0 %v117
    %413 = vmatpush.msra.mxu0 %v101
    %414 = vmatpush.msra.mxu0 %v85
    %415 = vmatmul.f32.gmra.mxu0 %v82
    %v416 = vpop.f32.mrf.mxu0
    %v417 = vadd.f32 %v345, %v416
    %418 = vmatmul.f32.gmra.mxu0 %v83
    %v419 = vpop.f32.mrf.mxu0
    %v420 = vadd.f32 %v345, %v419
    %421 = vdwg.mxu0
    %422 = vmatpush.msra.mxu0 %v326
    %423 = vmatpush.msra.mxu0 %v310
    %424 = vmatpush.msra.mxu0 %v294
    %425 = vmatpush.msra.mxu0 %v278
    %426 = vmatpush.msra.mxu0 %v262
    %427 = vmatpush.msra.mxu0 %v246
    %428 = vmatpush.msra.mxu0 %v230
    %429 = vmatpush.msra.mxu0 %v214
    %430 = vmatpush.msra.mxu0 %v198
    %431 = vmatpush.msra.mxu0 %v182
    %432 = vmatpush.msra.mxu0 %v166
    %433 = vmatpush.msra.mxu0 %v150
    %434 = vmatpush.msra.mxu0 %v134
    %435 = vmatpush.msra.mxu0 %v118
    %436 = vmatpush.msra.mxu0 %v102
    %437 = vmatpush.msra.mxu0 %v86
    %438 = vmatmul.f32.gmra.mxu0 %v82
    %v439 = vpop.f32.mrf.mxu0
    %v440 = vadd.f32 %v346, %v439
    %441 = vmatmul.f32.gmra.mxu0 %v83
    %v442 = vpop.f32.mrf.mxu0
    %v443 = vadd.f32 %v346, %v442
    %444 = vdwg.mxu0
    %445 = vmatpush.msra.mxu0 %v327
    %446 = vmatpush.msra.mxu0 %v311
    %447 = vmatpush.msra.mxu0 %v295
    %448 = vmatpush.msra.mxu0 %v279
    %449 = vmatpush.msra.mxu0 %v263
    %450 = vmatpush.msra.mxu0 %v247
    %451 = vmatpush.msra.mxu0 %v231
    %452 = vmatpush.msra.mxu0 %v215
    %453 = vmatpush.msra.mxu0 %v199
    %454 = vmatpush.msra.mxu0 %v183
    %455 = vmatpush.msra.mxu0 %v167
    %456 = vmatpush.msra.mxu0 %v151
    %457 = vmatpush.msra.mxu0 %v135
    %458 = vmatpush.msra.mxu0 %v119
    %459 = vmatpush.msra.mxu0 %v103
    %460 = vmatpush.msra.mxu0 %v87
    %461 = vmatmul.f32.gmra.mxu0 %v82
    %v462 = vpop.f32.mrf.mxu0
    %v463 = vadd.f32 %v347, %v462
    %464 = vmatmul.f32.gmra.mxu0 %v83
    %v465 = vpop.f32.mrf.mxu0
    %v466 = vadd.f32 %v347, %v465
    %467 = vdwg.mxu0
    %468 = vmatpush.msra.mxu0 %v328
    %469 = vmatpush.msra.mxu0 %v312
    %470 = vmatpush.msra.mxu0 %v296
    %471 = vmatpush.msra.mxu0 %v280
    %472 = vmatpush.msra.mxu0 %v264
    %473 = vmatpush.msra.mxu0 %v248
    %474 = vmatpush.msra.mxu0 %v232
    %475 = vmatpush.msra.mxu0 %v216
    %476 = vmatpush.msra.mxu0 %v200
    %477 = vmatpush.msra.mxu0 %v184
    %478 = vmatpush.msra.mxu0 %v168
    %479 = vmatpush.msra.mxu0 %v152
    %480 = vmatpush.msra.mxu0 %v136
    %481 = vmatpush.msra.mxu0 %v120
    %482 = vmatpush.msra.mxu0 %v104
    %483 = vmatpush.msra.mxu0 %v88
    %484 = vmatmul.f32.gmra.mxu0 %v82
    %v485 = vpop.f32.mrf.mxu0
    %v486 = vadd.f32 %v348, %v485
    %487 = vmatmul.f32.gmra.mxu0 %v83
    %v488 = vpop.f32.mrf.mxu0
    %v489 = vadd.f32 %v348, %v488
    %490 = vdwg.mxu0
    %491 = vmatpush.msra.mxu0 %v329
    %492 = vmatpush.msra.mxu0 %v313
    %493 = vmatpush.msra.mxu0 %v297
    %494 = vmatpush.msra.mxu0 %v281
    %495 = vmatpush.msra.mxu0 %v265
    %496 = vmatpush.msra.mxu0 %v249
    %497 = vmatpush.msra.mxu0 %v233
    %498 = vmatpush.msra.mxu0 %v217
    %499 = vmatpush.msra.mxu0 %v201
    %500 = vmatpush.msra.mxu0 %v185
    %501 = vmatpush.msra.mxu0 %v169
    %502 = vmatpush.msra.mxu0 %v153
    %503 = vmatpush.msra.mxu0 %v137
    %504 = vmatpush.msra.mxu0 %v121
    %505 = vmatpush.msra.mxu0 %v105
    %506 = vmatpush.msra.mxu0 %v89
    %507 = vmatmul.f32.gmra.mxu0 %v82
    %v508 = vpop.f32.mrf.mxu0
    %v509 = vadd.f32 %v349, %v508
    %510 = vmatmul.f32.gmra.mxu0 %v83
    %v511 = vpop.f32.mrf.mxu0
    %v512 = vadd.f32 %v349, %v511
    %513 = vdwg.mxu0
    %514 = vmatpush.msra.mxu0 %v330
    %515 = vmatpush.msra.mxu0 %v314
    %516 = vmatpush.msra.mxu0 %v298
    %517 = vmatpush.msra.mxu0 %v282
    %518 = vmatpush.msra.mxu0 %v266
    %519 = vmatpush.msra.mxu0 %v250
    %520 = vmatpush.msra.mxu0 %v234
    %521 = vmatpush.msra.mxu0 %v218
    %522 = vmatpush.msra.mxu0 %v202
    %523 = vmatpush.msra.mxu0 %v186
    %524 = vmatpush.msra.mxu0 %v170
    %525 = vmatpush.msra.mxu0 %v154
    %526 = vmatpush.msra.mxu0 %v138
    %527 = vmatpush.msra.mxu0 %v122
    %528 = vmatpush.msra.mxu0 %v106
    %529 = vmatpush.msra.mxu0 %v90
    %530 = vmatmul.f32.gmra.mxu0 %v82
    %v531 = vpop.f32.mrf.mxu0
    %v532 = vadd.f32 %v350, %v531
    %533 = vmatmul.f32.gmra.mxu0 %v83
    %v534 = vpop.f32.mrf.mxu0
    %v535 = vadd.f32 %v350, %v534
    %536 = vdwg.mxu0
    %537 = vmatpush.msra.mxu0 %v331
    %538 = vmatpush.msra.mxu0 %v315
    %539 = vmatpush.msra.mxu0 %v299
    %540 = vmatpush.msra.mxu0 %v283
    %541 = vmatpush.msra.mxu0 %v267
    %542 = vmatpush.msra.mxu0 %v251
    %543 = vmatpush.msra.mxu0 %v235
    %544 = vmatpush.msra.mxu0 %v219
    %545 = vmatpush.msra.mxu0 %v203
    %546 = vmatpush.msra.mxu0 %v187
    %547 = vmatpush.msra.mxu0 %v171
    %548 = vmatpush.msra.mxu0 %v155
    %549 = vmatpush.msra.mxu0 %v139
    %550 = vmatpush.msra.mxu0 %v123
    %551 = vmatpush.msra.mxu0 %v107
    %552 = vmatpush.msra.mxu0 %v91
    %553 = vmatmul.f32.gmra.mxu0 %v82
    %v554 = vpop.f32.mrf.mxu0
    %v555 = vadd.f32 %v351, %v554
    %556 = vmatmul.f32.gmra.mxu0 %v83
    %v557 = vpop.f32.mrf.mxu0
    %v558 = vadd.f32 %v351, %v557
    %559 = vdwg.mxu0
    %560 = vmatpush.msra.mxu0 %v332
    %561 = vmatpush.msra.mxu0 %v316
    %562 = vmatpush.msra.mxu0 %v300
    %563 = vmatpush.msra.mxu0 %v284
    %564 = vmatpush.msra.mxu0 %v268
    %565 = vmatpush.msra.mxu0 %v252
    %566 = vmatpush.msra.mxu0 %v236
    %567 = vmatpush.msra.mxu0 %v220
    %568 = vmatpush.msra.mxu0 %v204
    %569 = vmatpush.msra.mxu0 %v188
    %570 = vmatpush.msra.mxu0 %v172
    %571 = vmatpush.msra.mxu0 %v156
    %572 = vmatpush.msra.mxu0 %v140
    %573 = vmatpush.msra.mxu0 %v124
    %574 = vmatpush.msra.mxu0 %v108
    %575 = vmatpush.msra.mxu0 %v92
    %576 = vmatmul.f32.gmra.mxu0 %v82
    %v577 = vpop.f32.mrf.mxu0
    %v578 = vadd.f32 %v352, %v577
    %579 = vmatmul.f32.gmra.mxu0 %v83
    %v580 = vpop.f32.mrf.mxu0
    %v581 = vadd.f32 %v352, %v580
    %582 = vdwg.mxu0
    %583 = vmatpush.msra.mxu0 %v333
    %584 = vmatpush.msra.mxu0 %v317
    %585 = vmatpush.msra.mxu0 %v301
    %586 = vmatpush.msra.mxu0 %v285
    %587 = vmatpush.msra.mxu0 %v269
    %588 = vmatpush.msra.mxu0 %v253
    %589 = vmatpush.msra.mxu0 %v237
    %590 = vmatpush.msra.mxu0 %v221
    %591 = vmatpush.msra.mxu0 %v205
    %592 = vmatpush.msra.mxu0 %v189
    %593 = vmatpush.msra.mxu0 %v173
    %594 = vmatpush.msra.mxu0 %v157
    %595 = vmatpush.msra.mxu0 %v141
    %596 = vmatpush.msra.mxu0 %v125
    %597 = vmatpush.msra.mxu0 %v109
    %598 = vmatpush.msra.mxu0 %v93
    %599 = vmatmul.f32.gmra.mxu0 %v82
    %v600 = vpop.f32.mrf.mxu0
    %v601 = vadd.f32 %v353, %v600
    %602 = vmatmul.f32.gmra.mxu0 %v83
    %v603 = vpop.f32.mrf.mxu0
    %v604 = vadd.f32 %v353, %v603
    %605 = vdwg.mxu0
    %606 = vmatpush.msra.mxu0 %v334
    %607 = vmatpush.msra.mxu0 %v318
    %608 = vmatpush.msra.mxu0 %v302
    %609 = vmatpush.msra.mxu0 %v286
    %610 = vmatpush.msra.mxu0 %v270
    %611 = vmatpush.msra.mxu0 %v254
    %612 = vmatpush.msra.mxu0 %v238
    %613 = vmatpush.msra.mxu0 %v222
    %614 = vmatpush.msra.mxu0 %v206
    %615 = vmatpush.msra.mxu0 %v190
    %616 = vmatpush.msra.mxu0 %v174
    %617 = vmatpush.msra.mxu0 %v158
    %618 = vmatpush.msra.mxu0 %v142
    %619 = vmatpush.msra.mxu0 %v126
    %620 = vmatpush.msra.mxu0 %v110
    %621 = vmatpush.msra.mxu0 %v94
    %622 = vmatmul.f32.gmra.mxu0 %v82
    %v623 = vpop.f32.mrf.mxu0
    %v624 = vadd.f32 %v354, %v623
    %625 = vmatmul.f32.gmra.mxu0 %v83
    %v626 = vpop.f32.mrf.mxu0
    %v627 = vadd.f32 %v354, %v626
    %628 = vdwg.mxu0
    %629 = vmatpush.msra.mxu0 %v335
    %630 = vmatpush.msra.mxu0 %v319
    %631 = vmatpush.msra.mxu0 %v303
    %632 = vmatpush.msra.mxu0 %v287
    %633 = vmatpush.msra.mxu0 %v271
    %634 = vmatpush.msra.mxu0 %v255
    %635 = vmatpush.msra.mxu0 %v239
    %636 = vmatpush.msra.mxu0 %v223
    %637 = vmatpush.msra.mxu0 %v207
    %638 = vmatpush.msra.mxu0 %v191
    %639 = vmatpush.msra.mxu0 %v175
    %640 = vmatpush.msra.mxu0 %v159
    %641 = vmatpush.msra.mxu0 %v143
    %642 = vmatpush.msra.mxu0 %v127
    %643 = vmatpush.msra.mxu0 %v111
    %644 = vmatpush.msra.mxu0 %v95
    %645 = vmatmul.f32.gmra.mxu0 %v82
    %v646 = vpop.f32.mrf.mxu0
    %v647 = vadd.f32 %v355, %v646
    %648 = vmatmul.f32.gmra.mxu0 %v83
    %v649 = vpop.f32.mrf.mxu0
    %v650 = vadd.f32 %v355, %v649
    %651 = vdwg.mxu0
    %652 = vmatpush.msra.mxu0 %v336
    %653 = vmatpush.msra.mxu0 %v320
    %654 = vmatpush.msra.mxu0 %v304
    %655 = vmatpush.msra.mxu0 %v288
    %656 = vmatpush.msra.mxu0 %v272
    %657 = vmatpush.msra.mxu0 %v256
    %658 = vmatpush.msra.mxu0 %v240
    %659 = vmatpush.msra.mxu0 %v224
    %660 = vmatpush.msra.mxu0 %v208
    %661 = vmatpush.msra.mxu0 %v192
    %662 = vmatpush.msra.mxu0 %v176
    %663 = vmatpush.msra.mxu0 %v160
    %664 = vmatpush.msra.mxu0 %v144
    %665 = vmatpush.msra.mxu0 %v128
    %666 = vmatpush.msra.mxu0 %v112
    %667 = vmatpush.msra.mxu0 %v96
    %668 = vmatmul.f32.gmra.mxu0 %v82
    %v669 = vpop.f32.mrf.mxu0
    %v670 = vadd.f32 %v356, %v669
    %671 = vmatmul.f32.gmra.mxu0 %v83
    %v672 = vpop.f32.mrf.mxu0
    %v673 = vadd.f32 %v356, %v672
    %674 = vdwg.mxu0
    %675 = vmatpush.msra.mxu0 %v337
    %676 = vmatpush.msra.mxu0 %v321
    %677 = vmatpush.msra.mxu0 %v305
    %678 = vmatpush.msra.mxu0 %v289
    %679 = vmatpush.msra.mxu0 %v273
    %680 = vmatpush.msra.mxu0 %v257
    %681 = vmatpush.msra.mxu0 %v241
    %682 = vmatpush.msra.mxu0 %v225
    %683 = vmatpush.msra.mxu0 %v209
    %684 = vmatpush.msra.mxu0 %v193
    %685 = vmatpush.msra.mxu0 %v177
    %686 = vmatpush.msra.mxu0 %v161
    %687 = vmatpush.msra.mxu0 %v145
    %688 = vmatpush.msra.mxu0 %v129
    %689 = vmatpush.msra.mxu0 %v113
    %690 = vmatpush.msra.mxu0 %v97
    %691 = vmatmul.f32.gmra.mxu0 %v82
    %v692 = vpop.f32.mrf.mxu0
    %v693 = vadd.f32 %v357, %v692
    %694 = vmatmul.f32.gmra.mxu0 %v83
    %v695 = vpop.f32.mrf.mxu0
    %v696 = vadd.f32 %v357, %v695
    %697 = vdwg.mxu0
    %698 = vmatpush.msra.mxu0 %v338
    %699 = vmatpush.msra.mxu0 %v322
    %700 = vmatpush.msra.mxu0 %v306
    %701 = vmatpush.msra.mxu0 %v290
    %702 = vmatpush.msra.mxu0 %v274
    %703 = vmatpush.msra.mxu0 %v258
    %704 = vmatpush.msra.mxu0 %v242
    %705 = vmatpush.msra.mxu0 %v226
    %706 = vmatpush.msra.mxu0 %v210
    %707 = vmatpush.msra.mxu0 %v194
    %708 = vmatpush.msra.mxu0 %v178
    %709 = vmatpush.msra.mxu0 %v162
    %710 = vmatpush.msra.mxu0 %v146
    %711 = vmatpush.msra.mxu0 %v130
    %712 = vmatpush.msra.mxu0 %v114
    %713 = vmatpush.msra.mxu0 %v98
    %714 = vmatmul.f32.gmra.mxu0 %v82
    %v715 = vpop.f32.mrf.mxu0
    %v716 = vadd.f32 %v358, %v715
    %717 = vmatmul.f32.gmra.mxu0 %v83
    %v718 = vpop.f32.mrf.mxu0
    %v719 = vadd.f32 %v358, %v718
    %720 = vdwg.mxu0
    %721 = vmatpush.msra.mxu0 %v339
    %722 = vmatpush.msra.mxu0 %v323
    %723 = vmatpush.msra.mxu0 %v307
    %724 = vmatpush.msra.mxu0 %v291
    %725 = vmatpush.msra.mxu0 %v275
    %726 = vmatpush.msra.mxu0 %v259
    %727 = vmatpush.msra.mxu0 %v243
    %728 = vmatpush.msra.mxu0 %v227
    %729 = vmatpush.msra.mxu0 %v211
    %730 = vmatpush.msra.mxu0 %v195
    %731 = vmatpush.msra.mxu0 %v179
    %732 = vmatpush.msra.mxu0 %v163
    %733 = vmatpush.msra.mxu0 %v147
    %734 = vmatpush.msra.mxu0 %v131
    %735 = vmatpush.msra.mxu0 %v115
    %736 = vmatpush.msra.mxu0 %v99
    %737 = vmatmul.f32.gmra.mxu0 %v82
    %v738 = vpop.f32.mrf.mxu0
    %v739 = vadd.f32 %v359, %v738
    %740 = vmatmul.f32.gmra.mxu0 %v83
    %v741 = vpop.f32.mrf.mxu0
    %v742 = vadd.f32 %v359, %v741
    %743 = vdwg.mxu0
    %v744 = vmax.f32 %v394, 0.0
    %v745 = vmax.f32 %v417, 0.0
    %v746 = vmax.f32 %v440, 0.0
    %v747 = vmax.f32 %v463, 0.0
    %v748 = vmax.f32 %v486, 0.0
    %v749 = vmax.f32 %v509, 0.0
    %v750 = vmax.f32 %v532, 0.0
    %v751 = vmax.f32 %v555, 0.0
    %v752 = vmax.f32 %v578, 0.0
    %v753 = vmax.f32 %v601, 0.0
    %v754 = vmax.f32 %v624, 0.0
    %v755 = vmax.f32 %v647, 0.0
    %v756 = vmax.f32 %v670, 0.0
    %v757 = vmax.f32 %v693, 0.0
    %v758 = vmax.f32 %v716, 0.0
    %v759 = vmax.f32 %v739, 0.0
    %v760 = vmax.f32 %v397, 0.0
    %v761 = vmax.f32 %v420, 0.0
    %v762 = vmax.f32 %v443, 0.0
    %v763 = vmax.f32 %v466, 0.0
    %v764 = vmax.f32 %v489, 0.0
    %v765 = vmax.f32 %v512, 0.0
    %v766 = vmax.f32 %v535, 0.0
    %v767 = vmax.f32 %v558, 0.0
    %v768 = vmax.f32 %v581, 0.0
    %v769 = vmax.f32 %v604, 0.0
    %v770 = vmax.f32 %v627, 0.0
    %v771 = vmax.f32 %v650, 0.0
    %v772 = vmax.f32 %v673, 0.0
    %v773 = vmax.f32 %v696, 0.0
    %v774 = vmax.f32 %v719, 0.0
    %v775 = vmax.f32 %v742, 0.0
    %v776 = vld [vmem:[#allocation8] sm:$0xff]
    %v777 = vld [vmem:[#allocation8 + $0x8] sm:$0xff]
    %v778 = vld [vmem:[#allocation8 + $0x10] sm:$0xff]
    %v779 = vld [vmem:[#allocation8 + $0x18] sm:$0xff]
    %v780 = vld [vmem:[#allocation8 + $0x20] sm:$0xff]
    %v781 = vld [vmem:[#allocation8 + $0x28] sm:$0xff]
    %v782 = vld [vmem:[#allocation8 + $0x30] sm:$0xff]
    %v783 = vld [vmem:[#allocation8 + $0x38] sm:$0xff]
    %v784 = vld [vmem:[#allocation8 + $0x40] sm:$0xff]
    %v785 = vld [vmem:[#allocation8 + $0x48] sm:$0xff]
    %v786 = vld [vmem:[#allocation8 + $0x50] sm:$0xff]
    %v787 = vld [vmem:[#allocation8 + $0x58] sm:$0xff]
    %v788 = vld [vmem:[#allocation8 + $0x60] sm:$0xff]
    %v789 = vld [vmem:[#allocation8 + $0x68] sm:$0xff]
    %v790 = vld [vmem:[#allocation8 + $0x70] sm:$0xff]
    %v791 = vld [vmem:[#allocation8 + $0x78] sm:$0xff]
    %v792 = vld [vmem:[#allocation8 + $0x80] sm:$0xff]
    %v793 = vld [vmem:[#allocation8 + $0x88] sm:$0xff]
    %v794 = vld [vmem:[#allocation8 + $0x90] sm:$0xff]
    %v795 = vld [vmem:[#allocation8 + $0x98] sm:$0xff]
    %v796 = vld [vmem:[#allocation8 + $0xa0] sm:$0xff]
    %v797 = vld [vmem:[#allocation8 + $0xa8] sm:$0xff]
    %v798 = vld [vmem:[#allocation8 + $0xb0] sm:$0xff]
    %v799 = vld [vmem:[#allocation8 + $0xb8] sm:$0xff]
    %v800 = vld [vmem:[#allocation8 + $0xc0] sm:$0xff]
    %v801 = vld [vmem:[#allocation8 + $0xc8] sm:$0xff]
    %v802 = vld [vmem:[#allocation8 + $0xd0] sm:$0xff]
    %v803 = vld [vmem:[#allocation8 + $0xd8] sm:$0xff]
    %v804 = vld [vmem:[#allocation8 + $0xe0] sm:$0xff]
    %v805 = vld [vmem:[#allocation8 + $0xe8] sm:$0xff]
    %v806 = vld [vmem:[#allocation8 + $0xf0] sm:$0xff]
    %v807 = vld [vmem:[#allocation8 + $0xf8] sm:$0xff]
    %v808 = vld [vmem:[#allocation8 + $0x100] sm:$0xff]
    %v809 = vld [vmem:[#allocation8 + $0x108] sm:$0xff]
    %v810 = vld [vmem:[#allocation8 + $0x110] sm:$0xff]
    %v811 = vld [vmem:[#allocation8 + $0x118] sm:$0xff]
    %v812 = vld [vmem:[#allocation8 + $0x120] sm:$0xff]
    %v813 = vld [vmem:[#allocation8 + $0x128] sm:$0xff]
    %v814 = vld [vmem:[#allocation8 + $0x130] sm:$0xff]
    %v815 = vld [vmem:[#allocation8 + $0x138] sm:$0xff]
    %v816 = vld [vmem:[#allocation8 + $0x140] sm:$0xff]
    %v817 = vld [vmem:[#allocation8 + $0x148] sm:$0xff]
    %v818 = vld [vmem:[#allocation8 + $0x150] sm:$0xff]
    %v819 = vld [vmem:[#allocation8 + $0x158] sm:$0xff]
    %v820 = vld [vmem:[#allocation8 + $0x160] sm:$0xff]
    %v821 = vld [vmem:[#allocation8 + $0x168] sm:$0xff]
    %v822 = vld [vmem:[#allocation8 + $0x170] sm:$0xff]
    %v823 = vld [vmem:[#allocation8 + $0x178] sm:$0xff]
    %v824 = vld [vmem:[#allocation8 + $0x180] sm:$0xff]
    %v825 = vld [vmem:[#allocation8 + $0x188] sm:$0xff]
    %v826 = vld [vmem:[#allocation8 + $0x190] sm:$0xff]
    %v827 = vld [vmem:[#allocation8 + $0x198] sm:$0xff]
    %v828 = vld [vmem:[#allocation8 + $0x1a0] sm:$0xff]
    %v829 = vld [vmem:[#allocation8 + $0x1a8] sm:$0xff]
    %v830 = vld [vmem:[#allocation8 + $0x1b0] sm:$0xff]
    %v831 = vld [vmem:[#allocation8 + $0x1b8] sm:$0xff]
    %v832 = vld [vmem:[#allocation8 + $0x1c0] sm:$0xff]
    %v833 = vld [vmem:[#allocation8 + $0x1c8] sm:$0xff]
    %v834 = vld [vmem:[#allocation8 + $0x1d0] sm:$0xff]
    %v835 = vld [vmem:[#allocation8 + $0x1d8] sm:$0xff]
    %v836 = vld [vmem:[#allocation8 + $0x1e0] sm:$0xff]
    %v837 = vld [vmem:[#allocation8 + $0x1e8] sm:$0xff]
    %v838 = vld [vmem:[#allocation8 + $0x1f0] sm:$0xff]
    %v839 = vld [vmem:[#allocation8 + $0x1f8] sm:$0xff]
    %v840 = vld [vmem:[#allocation8 + $0x200] sm:$0xff]
    %v841 = vld [vmem:[#allocation8 + $0x208] sm:$0xff]
    %v842 = vld [vmem:[#allocation8 + $0x210] sm:$0xff]
    %v843 = vld [vmem:[#allocation8 + $0x218] sm:$0xff]
    %v844 = vld [vmem:[#allocation8 + $0x220] sm:$0xff]
    %v845 = vld [vmem:[#allocation8 + $0x228] sm:$0xff]
    %v846 = vld [vmem:[#allocation8 + $0x230] sm:$0xff]
    %v847 = vld [vmem:[#allocation8 + $0x238] sm:$0xff]
    %v848 = vld [vmem:[#allocation8 + $0x240] sm:$0xff]
    %v849 = vld [vmem:[#allocation8 + $0x248] sm:$0xff]
    %v850 = vld [vmem:[#allocation8 + $0x250] sm:$0xff]
    %v851 = vld [vmem:[#allocation8 + $0x258] sm:$0xff]
    %v852 = vld [vmem:[#allocation8 + $0x260] sm:$0xff]
    %v853 = vld [vmem:[#allocation8 + $0x268] sm:$0xff]
    %v854 = vld [vmem:[#allocation8 + $0x270] sm:$0xff]
    %v855 = vld [vmem:[#allocation8 + $0x278] sm:$0xff]
    %v856 = vld [vmem:[#allocation8 + $0x280] sm:$0xff]
    %v857 = vld [vmem:[#allocation8 + $0x288] sm:$0xff]
    %v858 = vld [vmem:[#allocation8 + $0x290] sm:$0xff]
    %v859 = vld [vmem:[#allocation8 + $0x298] sm:$0xff]
    %v860 = vld [vmem:[#allocation8 + $0x2a0] sm:$0xff]
    %v861 = vld [vmem:[#allocation8 + $0x2a8] sm:$0xff]
    %v862 = vld [vmem:[#allocation8 + $0x2b0] sm:$0xff]
    %v863 = vld [vmem:[#allocation8 + $0x2b8] sm:$0xff]
    %v864 = vld [vmem:[#allocation8 + $0x2c0] sm:$0xff]
    %v865 = vld [vmem:[#allocation8 + $0x2c8] sm:$0xff]
    %v866 = vld [vmem:[#allocation8 + $0x2d0] sm:$0xff]
    %v867 = vld [vmem:[#allocation8 + $0x2d8] sm:$0xff]
    %v868 = vld [vmem:[#allocation8 + $0x2e0] sm:$0xff]
    %v869 = vld [vmem:[#allocation8 + $0x2e8] sm:$0xff]
    %v870 = vld [vmem:[#allocation8 + $0x2f0] sm:$0xff]
    %v871 = vld [vmem:[#allocation8 + $0x2f8] sm:$0xff]
    %v872 = vld [vmem:[#allocation8 + $0x300] sm:$0xff]
    %v873 = vld [vmem:[#allocation8 + $0x308] sm:$0xff]
    %v874 = vld [vmem:[#allocation8 + $0x310] sm:$0xff]
    %v875 = vld [vmem:[#allocation8 + $0x318] sm:$0xff]
    %v876 = vld [vmem:[#allocation8 + $0x320] sm:$0xff]
    %v877 = vld [vmem:[#allocation8 + $0x328] sm:$0xff]
    %v878 = vld [vmem:[#allocation8 + $0x330] sm:$0xff]
    %v879 = vld [vmem:[#allocation8 + $0x338] sm:$0xff]
    %v880 = vld [vmem:[#allocation8 + $0x340] sm:$0xff]
    %v881 = vld [vmem:[#allocation8 + $0x348] sm:$0xff]
    %v882 = vld [vmem:[#allocation8 + $0x350] sm:$0xff]
    %v883 = vld [vmem:[#allocation8 + $0x358] sm:$0xff]
    %v884 = vld [vmem:[#allocation8 + $0x360] sm:$0xff]
    %v885 = vld [vmem:[#allocation8 + $0x368] sm:$0xff]
    %v886 = vld [vmem:[#allocation8 + $0x370] sm:$0xff]
    %v887 = vld [vmem:[#allocation8 + $0x378] sm:$0xff]
    %v888 = vld [vmem:[#allocation8 + $0x380] sm:$0xff]
    %v889 = vld [vmem:[#allocation8 + $0x388] sm:$0xff]
    %v890 = vld [vmem:[#allocation8 + $0x390] sm:$0xff]
    %v891 = vld [vmem:[#allocation8 + $0x398] sm:$0xff]
    %v892 = vld [vmem:[#allocation8 + $0x3a0] sm:$0xff]
    %v893 = vld [vmem:[#allocation8 + $0x3a8] sm:$0xff]
    %v894 = vld [vmem:[#allocation8 + $0x3b0] sm:$0xff]
    %v895 = vld [vmem:[#allocation8 + $0x3b8] sm:$0xff]
    %v896 = vld [vmem:[#allocation8 + $0x3c0] sm:$0xff]
    %v897 = vld [vmem:[#allocation8 + $0x3c8] sm:$0xff]
    %v898 = vld [vmem:[#allocation8 + $0x3d0] sm:$0xff]
    %v899 = vld [vmem:[#allocation8 + $0x3d8] sm:$0xff]
    %v900 = vld [vmem:[#allocation8 + $0x3e0] sm:$0xff]
    %v901 = vld [vmem:[#allocation8 + $0x3e8] sm:$0xff]
    %v902 = vld [vmem:[#allocation8 + $0x3f0] sm:$0xff]
    %v903 = vld [vmem:[#allocation8 + $0x3f8] sm:$0xff]
    %v904 = vld [vmem:[#allocation8 + $0x400] sm:$0xff]
    %v905 = vld [vmem:[#allocation8 + $0x408] sm:$0xff]
    %v906 = vld [vmem:[#allocation8 + $0x410] sm:$0xff]
    %v907 = vld [vmem:[#allocation8 + $0x418] sm:$0xff]
    %v908 = vld [vmem:[#allocation8 + $0x420] sm:$0xff]
    %v909 = vld [vmem:[#allocation8 + $0x428] sm:$0xff]
    %v910 = vld [vmem:[#allocation8 + $0x430] sm:$0xff]
    %v911 = vld [vmem:[#allocation8 + $0x438] sm:$0xff]
    %v912 = vld [vmem:[#allocation8 + $0x440] sm:$0xff]
    %v913 = vld [vmem:[#allocation8 + $0x448] sm:$0xff]
    %v914 = vld [vmem:[#allocation8 + $0x450] sm:$0xff]
    %v915 = vld [vmem:[#allocation8 + $0x458] sm:$0xff]
    %v916 = vld [vmem:[#allocation8 + $0x460] sm:$0xff]
    %v917 = vld [vmem:[#allocation8 + $0x468] sm:$0xff]
    %v918 = vld [vmem:[#allocation8 + $0x470] sm:$0xff]
    %v919 = vld [vmem:[#allocation8 + $0x478] sm:$0xff]
    %v920 = vld [vmem:[#allocation8 + $0x480] sm:$0xff]
    %v921 = vld [vmem:[#allocation8 + $0x488] sm:$0xff]
    %v922 = vld [vmem:[#allocation8 + $0x490] sm:$0xff]
    %v923 = vld [vmem:[#allocation8 + $0x498] sm:$0xff]
    %v924 = vld [vmem:[#allocation8 + $0x4a0] sm:$0xff]
    %v925 = vld [vmem:[#allocation8 + $0x4a8] sm:$0xff]
    %v926 = vld [vmem:[#allocation8 + $0x4b0] sm:$0xff]
    %v927 = vld [vmem:[#allocation8 + $0x4b8] sm:$0xff]
    %v928 = vld [vmem:[#allocation8 + $0x4c0] sm:$0xff]
    %v929 = vld [vmem:[#allocation8 + $0x4c8] sm:$0xff]
    %v930 = vld [vmem:[#allocation8 + $0x4d0] sm:$0xff]
    %v931 = vld [vmem:[#allocation8 + $0x4d8] sm:$0xff]
    %v932 = vld [vmem:[#allocation8 + $0x4e0] sm:$0xff]
    %v933 = vld [vmem:[#allocation8 + $0x4e8] sm:$0xff]
    %v934 = vld [vmem:[#allocation8 + $0x4f0] sm:$0xff]
    %v935 = vld [vmem:[#allocation8 + $0x4f8] sm:$0xff]
    %v936 = vld [vmem:[#allocation8 + $0x500] sm:$0xff]
    %v937 = vld [vmem:[#allocation8 + $0x508] sm:$0xff]
    %v938 = vld [vmem:[#allocation8 + $0x510] sm:$0xff]
    %v939 = vld [vmem:[#allocation8 + $0x518] sm:$0xff]
    %v940 = vld [vmem:[#allocation8 + $0x520] sm:$0xff]
    %v941 = vld [vmem:[#allocation8 + $0x528] sm:$0xff]
    %v942 = vld [vmem:[#allocation8 + $0x530] sm:$0xff]
    %v943 = vld [vmem:[#allocation8 + $0x538] sm:$0xff]
    %v944 = vld [vmem:[#allocation8 + $0x540] sm:$0xff]
    %v945 = vld [vmem:[#allocation8 + $0x548] sm:$0xff]
    %v946 = vld [vmem:[#allocation8 + $0x550] sm:$0xff]
    %v947 = vld [vmem:[#allocation8 + $0x558] sm:$0xff]
    %v948 = vld [vmem:[#allocation8 + $0x560] sm:$0xff]
    %v949 = vld [vmem:[#allocation8 + $0x568] sm:$0xff]
    %v950 = vld [vmem:[#allocation8 + $0x570] sm:$0xff]
    %v951 = vld [vmem:[#allocation8 + $0x578] sm:$0xff]
    %v952 = vld [vmem:[#allocation8 + $0x580] sm:$0xff]
    %v953 = vld [vmem:[#allocation8 + $0x588] sm:$0xff]
    %v954 = vld [vmem:[#allocation8 + $0x590] sm:$0xff]
    %v955 = vld [vmem:[#allocation8 + $0x598] sm:$0xff]
    %v956 = vld [vmem:[#allocation8 + $0x5a0] sm:$0xff]
    %v957 = vld [vmem:[#allocation8 + $0x5a8] sm:$0xff]
    %v958 = vld [vmem:[#allocation8 + $0x5b0] sm:$0xff]
    %v959 = vld [vmem:[#allocation8 + $0x5b8] sm:$0xff]
    %v960 = vld [vmem:[#allocation8 + $0x5c0] sm:$0xff]
    %v961 = vld [vmem:[#allocation8 + $0x5c8] sm:$0xff]
    %v962 = vld [vmem:[#allocation8 + $0x5d0] sm:$0xff]
    %v963 = vld [vmem:[#allocation8 + $0x5d8] sm:$0xff]
    %v964 = vld [vmem:[#allocation8 + $0x5e0] sm:$0xff]
    %v965 = vld [vmem:[#allocation8 + $0x5e8] sm:$0xff]
    %v966 = vld [vmem:[#allocation8 + $0x5f0] sm:$0xff]
    %v967 = vld [vmem:[#allocation8 + $0x5f8] sm:$0xff]
    %v968 = vld [vmem:[#allocation8 + $0x600] sm:$0xff]
    %v969 = vld [vmem:[#allocation8 + $0x608] sm:$0xff]
    %v970 = vld [vmem:[#allocation8 + $0x610] sm:$0xff]
    %v971 = vld [vmem:[#allocation8 + $0x618] sm:$0xff]
    %v972 = vld [vmem:[#allocation8 + $0x620] sm:$0xff]
    %v973 = vld [vmem:[#allocation8 + $0x628] sm:$0xff]
    %v974 = vld [vmem:[#allocation8 + $0x630] sm:$0xff]
    %v975 = vld [vmem:[#allocation8 + $0x638] sm:$0xff]
    %v976 = vld [vmem:[#allocation8 + $0x640] sm:$0xff]
    %v977 = vld [vmem:[#allocation8 + $0x648] sm:$0xff]
    %v978 = vld [vmem:[#allocation8 + $0x650] sm:$0xff]
    %v979 = vld [vmem:[#allocation8 + $0x658] sm:$0xff]
    %v980 = vld [vmem:[#allocation8 + $0x660] sm:$0xff]
    %v981 = vld [vmem:[#allocation8 + $0x668] sm:$0xff]
    %v982 = vld [vmem:[#allocation8 + $0x670] sm:$0xff]
    %v983 = vld [vmem:[#allocation8 + $0x678] sm:$0xff]
    %v984 = vld [vmem:[#allocation8 + $0x680] sm:$0xff]
    %v985 = vld [vmem:[#allocation8 + $0x688] sm:$0xff]
    %v986 = vld [vmem:[#allocation8 + $0x690] sm:$0xff]
    %v987 = vld [vmem:[#allocation8 + $0x698] sm:$0xff]
    %v988 = vld [vmem:[#allocation8 + $0x6a0] sm:$0xff]
    %v989 = vld [vmem:[#allocation8 + $0x6a8] sm:$0xff]
    %v990 = vld [vmem:[#allocation8 + $0x6b0] sm:$0xff]
    %v991 = vld [vmem:[#allocation8 + $0x6b8] sm:$0xff]
    %v992 = vld [vmem:[#allocation8 + $0x6c0] sm:$0xff]
    %v993 = vld [vmem:[#allocation8 + $0x6c8] sm:$0xff]
    %v994 = vld [vmem:[#allocation8 + $0x6d0] sm:$0xff]
    %v995 = vld [vmem:[#allocation8 + $0x6d8] sm:$0xff]
    %v996 = vld [vmem:[#allocation8 + $0x6e0] sm:$0xff]
    %v997 = vld [vmem:[#allocation8 + $0x6e8] sm:$0xff]
    %v998 = vld [vmem:[#allocation8 + $0x6f0] sm:$0xff]
    %v999 = vld [vmem:[#allocation8 + $0x6f8] sm:$0xff]
    %v1000 = vld [vmem:[#allocation8 + $0x700] sm:$0xff]
    %v1001 = vld [vmem:[#allocation8 + $0x708] sm:$0xff]
    %v1002 = vld [vmem:[#allocation8 + $0x710] sm:$0xff]
    %v1003 = vld [vmem:[#allocation8 + $0x718] sm:$0xff]
    %v1004 = vld [vmem:[#allocation8 + $0x720] sm:$0xff]
    %v1005 = vld [vmem:[#allocation8 + $0x728] sm:$0xff]
    %v1006 = vld [vmem:[#allocation8 + $0x730] sm:$0xff]
    %v1007 = vld [vmem:[#allocation8 + $0x738] sm:$0xff]
    %v1008 = vld [vmem:[#allocation8 + $0x740] sm:$0xff]
    %v1009 = vld [vmem:[#allocation8 + $0x748] sm:$0xff]
    %v1010 = vld [vmem:[#allocation8 + $0x750] sm:$0xff]
    %v1011 = vld [vmem:[#allocation8 + $0x758] sm:$0xff]
    %v1012 = vld [vmem:[#allocation8 + $0x760] sm:$0xff]
    %v1013 = vld [vmem:[#allocation8 + $0x768] sm:$0xff]
    %v1014 = vld [vmem:[#allocation8 + $0x770] sm:$0xff]
    %v1015 = vld [vmem:[#allocation8 + $0x778] sm:$0xff]
    %v1016 = vld [vmem:[#allocation8 + $0x780] sm:$0xff]
    %v1017 = vld [vmem:[#allocation8 + $0x788] sm:$0xff]
    %v1018 = vld [vmem:[#allocation8 + $0x790] sm:$0xff]
    %v1019 = vld [vmem:[#allocation8 + $0x798] sm:$0xff]
    %v1020 = vld [vmem:[#allocation8 + $0x7a0] sm:$0xff]
    %v1021 = vld [vmem:[#allocation8 + $0x7a8] sm:$0xff]
    %v1022 = vld [vmem:[#allocation8 + $0x7b0] sm:$0xff]
    %v1023 = vld [vmem:[#allocation8 + $0x7b8] sm:$0xff]
    %v1024 = vld [vmem:[#allocation8 + $0x7c0] sm:$0xff]
    %v1025 = vld [vmem:[#allocation8 + $0x7c8] sm:$0xff]
    %v1026 = vld [vmem:[#allocation8 + $0x7d0] sm:$0xff]
    %v1027 = vld [vmem:[#allocation8 + $0x7d8] sm:$0xff]
    %v1028 = vld [vmem:[#allocation8 + $0x7e0] sm:$0xff]
    %v1029 = vld [vmem:[#allocation8 + $0x7e8] sm:$0xff]
    %v1030 = vld [vmem:[#allocation8 + $0x7f0] sm:$0xff]
    %v1031 = vld [vmem:[#allocation8 + $0x7f8] sm:$0xff]
    %v1032 = vld [vmem:[%s4] sm:$0x1]
    %v1034 = vperm.slane %v1032, 0
    %1036 = vmatpush.msra.mxu0 %v791
    %1037 = vmatpush.msra.mxu0 %v790
    %1038 = vmatpush.msra.mxu0 %v789
    %1039 = vmatpush.msra.mxu0 %v788
    %1040 = vmatpush.msra.mxu0 %v787
    %1041 = vmatpush.msra.mxu0 %v786
    %1042 = vmatpush.msra.mxu0 %v785
    %1043 = vmatpush.msra.mxu0 %v784
    %1044 = vmatpush.msra.mxu0 %v783
    %1045 = vmatpush.msra.mxu0 %v782
    %1046 = vmatpush.msra.mxu0 %v781
    %1047 = vmatpush.msra.mxu0 %v780
    %1048 = vmatpush.msra.mxu0 %v779
    %1049 = vmatpush.msra.mxu0 %v778
    %1050 = vmatpush.msra.mxu0 %v777
    %1051 = vmatpush.msra.mxu0 %v776
    %1052 = vmatmul.f32.gmra.mxu0 %v744
    %v1053 = vpop.f32.mrf.mxu0
    %v1054 = vadd.f32 %v1034, %v1053
    %1055 = vmatmul.f32.gmra.mxu0 %v760
    %v1056 = vpop.f32.mrf.mxu0
    %v1057 = vadd.f32 %v1034, %v1056
    %1058 = vdwg.mxu0
    %1059 = vmatpush.msra.mxu0 %v807
    %1060 = vmatpush.msra.mxu0 %v806
    %1061 = vmatpush.msra.mxu0 %v805
    %1062 = vmatpush.msra.mxu0 %v804
    %1063 = vmatpush.msra.mxu0 %v803
    %1064 = vmatpush.msra.mxu0 %v802
    %1065 = vmatpush.msra.mxu0 %v801
    %1066 = vmatpush.msra.mxu0 %v800
    %1067 = vmatpush.msra.mxu0 %v799
    %1068 = vmatpush.msra.mxu0 %v798
    %1069 = vmatpush.msra.mxu0 %v797
    %1070 = vmatpush.msra.mxu0 %v796
    %1071 = vmatpush.msra.mxu0 %v795
    %1072 = vmatpush.msra.mxu0 %v794
    %1073 = vmatpush.msra.mxu0 %v793
    %1074 = vmatpush.msra.mxu0 %v792
    %1075 = vmatmul.f32.gmra.mxu0 %v745
    %v1076 = vpop.f32.mrf.mxu0
    %v1077 = vadd.f32 %v1054, %v1076
    %1078 = vmatmul.f32.gmra.mxu0 %v761
    %v1079 = vpop.f32.mrf.mxu0
    %v1080 = vadd.f32 %v1057, %v1079
    %1081 = vdwg.mxu0
    %1082 = vmatpush.msra.mxu0 %v823
    %1083 = vmatpush.msra.mxu0 %v822
    %1084 = vmatpush.msra.mxu0 %v821
    %1085 = vmatpush.msra.mxu0 %v820
    %1086 = vmatpush.msra.mxu0 %v819
    %1087 = vmatpush.msra.mxu0 %v818
    %1088 = vmatpush.msra.mxu0 %v817
    %1089 = vmatpush.msra.mxu0 %v816
    %1090 = vmatpush.msra.mxu0 %v815
    %1091 = vmatpush.msra.mxu0 %v814
    %1092 = vmatpush.msra.mxu0 %v813
    %1093 = vmatpush.msra.mxu0 %v812
    %1094 = vmatpush.msra.mxu0 %v811
    %1095 = vmatpush.msra.mxu0 %v810
    %1096 = vmatpush.msra.mxu0 %v809
    %1097 = vmatpush.msra.mxu0 %v808
    %1098 = vmatmul.f32.gmra.mxu0 %v746
    %v1099 = vpop.f32.mrf.mxu0
    %v1100 = vadd.f32 %v1077, %v1099
    %1101 = vmatmul.f32.gmra.mxu0 %v762
    %v1102 = vpop.f32.mrf.mxu0
    %v1103 = vadd.f32 %v1080, %v1102
    %1104 = vdwg.mxu0
    %1105 = vmatpush.msra.mxu0 %v839
    %1106 = vmatpush.msra.mxu0 %v838
    %1107 = vmatpush.msra.mxu0 %v837
    %1108 = vmatpush.msra.mxu0 %v836
    %1109 = vmatpush.msra.mxu0 %v835
    %1110 = vmatpush.msra.mxu0 %v834
    %1111 = vmatpush.msra.mxu0 %v833
    %1112 = vmatpush.msra.mxu0 %v832
    %1113 = vmatpush.msra.mxu0 %v831
    %1114 = vmatpush.msra.mxu0 %v830
    %1115 = vmatpush.msra.mxu0 %v829
    %1116 = vmatpush.msra.mxu0 %v828
    %1117 = vmatpush.msra.mxu0 %v827
    %1118 = vmatpush.msra.mxu0 %v826
    %1119 = vmatpush.msra.mxu0 %v825
    %1120 = vmatpush.msra.mxu0 %v824
    %1121 = vmatmul.f32.gmra.mxu0 %v747
    %v1122 = vpop.f32.mrf.mxu0
    %v1123 = vadd.f32 %v1100, %v1122
    %1124 = vmatmul.f32.gmra.mxu0 %v763
    %v1125 = vpop.f32.mrf.mxu0
    %v1126 = vadd.f32 %v1103, %v1125
    %1127 = vdwg.mxu0
    %1128 = vmatpush.msra.mxu0 %v855
    %1129 = vmatpush.msra.mxu0 %v854
    %1130 = vmatpush.msra.mxu0 %v853
    %1131 = vmatpush.msra.mxu0 %v852
    %1132 = vmatpush.msra.mxu0 %v851
    %1133 = vmatpush.msra.mxu0 %v850
    %1134 = vmatpush.msra.mxu0 %v849
    %1135 = vmatpush.msra.mxu0 %v848
    %1136 = vmatpush.msra.mxu0 %v847
    %1137 = vmatpush.msra.mxu0 %v846
    %1138 = vmatpush.msra.mxu0 %v845
    %1139 = vmatpush.msra.mxu0 %v844
    %1140 = vmatpush.msra.mxu0 %v843
    %1141 = vmatpush.msra.mxu0 %v842
    %1142 = vmatpush.msra.mxu0 %v841
    %1143 = vmatpush.msra.mxu0 %v840
    %1144 = vmatmul.f32.gmra.mxu0 %v748
    %v1145 = vpop.f32.mrf.mxu0
    %v1146 = vadd.f32 %v1123, %v1145
    %1147 = vmatmul.f32.gmra.mxu0 %v764
    %v1148 = vpop.f32.mrf.mxu0
    %v1149 = vadd.f32 %v1126, %v1148
    %1150 = vdwg.mxu0
    %1151 = vmatpush.msra.mxu0 %v871
    %1152 = vmatpush.msra.mxu0 %v870
    %1153 = vmatpush.msra.mxu0 %v869
    %1154 = vmatpush.msra.mxu0 %v868
    %1155 = vmatpush.msra.mxu0 %v867
    %1156 = vmatpush.msra.mxu0 %v866
    %1157 = vmatpush.msra.mxu0 %v865
    %1158 = vmatpush.msra.mxu0 %v864
    %1159 = vmatpush.msra.mxu0 %v863
    %1160 = vmatpush.msra.mxu0 %v862
    %1161 = vmatpush.msra.mxu0 %v861
    %1162 = vmatpush.msra.mxu0 %v860
    %1163 = vmatpush.msra.mxu0 %v859
    %1164 = vmatpush.msra.mxu0 %v858
    %1165 = vmatpush.msra.mxu0 %v857
    %1166 = vmatpush.msra.mxu0 %v856
    %1167 = vmatmul.f32.gmra.mxu0 %v749
    %v1168 = vpop.f32.mrf.mxu0
    %v1169 = vadd.f32 %v1146, %v1168
    %1170 = vmatmul.f32.gmra.mxu0 %v765
    %v1171 = vpop.f32.mrf.mxu0
    %v1172 = vadd.f32 %v1149, %v1171
    %1173 = vdwg.mxu0
    %1174 = vmatpush.msra.mxu0 %v887
    %1175 = vmatpush.msra.mxu0 %v886
    %1176 = vmatpush.msra.mxu0 %v885
    %1177 = vmatpush.msra.mxu0 %v884
    %1178 = vmatpush.msra.mxu0 %v883
    %1179 = vmatpush.msra.mxu0 %v882
    %1180 = vmatpush.msra.mxu0 %v881
    %1181 = vmatpush.msra.mxu0 %v880
    %1182 = vmatpush.msra.mxu0 %v879
    %1183 = vmatpush.msra.mxu0 %v878
    %1184 = vmatpush.msra.mxu0 %v877
    %1185 = vmatpush.msra.mxu0 %v876
    %1186 = vmatpush.msra.mxu0 %v875
    %1187 = vmatpush.msra.mxu0 %v874
    %1188 = vmatpush.msra.mxu0 %v873
    %1189 = vmatpush.msra.mxu0 %v872
    %1190 = vmatmul.f32.gmra.mxu0 %v750
    %v1191 = vpop.f32.mrf.mxu0
    %v1192 = vadd.f32 %v1169, %v1191
    %1193 = vmatmul.f32.gmra.mxu0 %v766
    %v1194 = vpop.f32.mrf.mxu0
    %v1195 = vadd.f32 %v1172, %v1194
    %1196 = vdwg.mxu0
    %1197 = vmatpush.msra.mxu0 %v903
    %1198 = vmatpush.msra.mxu0 %v902
    %1199 = vmatpush.msra.mxu0 %v901
    %1200 = vmatpush.msra.mxu0 %v900
    %1201 = vmatpush.msra.mxu0 %v899
    %1202 = vmatpush.msra.mxu0 %v898
    %1203 = vmatpush.msra.mxu0 %v897
    %1204 = vmatpush.msra.mxu0 %v896
    %1205 = vmatpush.msra.mxu0 %v895
    %1206 = vmatpush.msra.mxu0 %v894
    %1207 = vmatpush.msra.mxu0 %v893
    %1208 = vmatpush.msra.mxu0 %v892
    %1209 = vmatpush.msra.mxu0 %v891
    %1210 = vmatpush.msra.mxu0 %v890
    %1211 = vmatpush.msra.mxu0 %v889
    %1212 = vmatpush.msra.mxu0 %v888
    %1213 = vmatmul.f32.gmra.mxu0 %v751
    %v1214 = vpop.f32.mrf.mxu0
    %v1215 = vadd.f32 %v1192, %v1214
    %1216 = vmatmul.f32.gmra.mxu0 %v767
    %v1217 = vpop.f32.mrf.mxu0
    %v1218 = vadd.f32 %v1195, %v1217
    %1219 = vdwg.mxu0
    %1220 = vmatpush.msra.mxu0 %v919
    %1221 = vmatpush.msra.mxu0 %v918
    %1222 = vmatpush.msra.mxu0 %v917
    %1223 = vmatpush.msra.mxu0 %v916
    %1224 = vmatpush.msra.mxu0 %v915
    %1225 = vmatpush.msra.mxu0 %v914
    %1226 = vmatpush.msra.mxu0 %v913
    %1227 = vmatpush.msra.mxu0 %v912
    %1228 = vmatpush.msra.mxu0 %v911
    %1229 = vmatpush.msra.mxu0 %v910
    %1230 = vmatpush.msra.mxu0 %v909
    %1231 = vmatpush.msra.mxu0 %v908
    %1232 = vmatpush.msra.mxu0 %v907
    %1233 = vmatpush.msra.mxu0 %v906
    %1234 = vmatpush.msra.mxu0 %v905
    %1235 = vmatpush.msra.mxu0 %v904
    %1236 = vmatmul.f32.gmra.mxu0 %v752
    %v1237 = vpop.f32.mrf.mxu0
    %v1238 = vadd.f32 %v1215, %v1237
    %1239 = vmatmul.f32.gmra.mxu0 %v768
    %v1240 = vpop.f32.mrf.mxu0
    %v1241 = vadd.f32 %v1218, %v1240
    %1242 = vdwg.mxu0
    %1243 = vmatpush.msra.mxu0 %v935
    %1244 = vmatpush.msra.mxu0 %v934
    %1245 = vmatpush.msra.mxu0 %v933
    %1246 = vmatpush.msra.mxu0 %v932
    %1247 = vmatpush.msra.mxu0 %v931
    %1248 = vmatpush.msra.mxu0 %v930
    %1249 = vmatpush.msra.mxu0 %v929
    %1250 = vmatpush.msra.mxu0 %v928
    %1251 = vmatpush.msra.mxu0 %v927
    %1252 = vmatpush.msra.mxu0 %v926
    %1253 = vmatpush.msra.mxu0 %v925
    %1254 = vmatpush.msra.mxu0 %v924
    %1255 = vmatpush.msra.mxu0 %v923
    %1256 = vmatpush.msra.mxu0 %v922
    %1257 = vmatpush.msra.mxu0 %v921
    %1258 = vmatpush.msra.mxu0 %v920
    %1259 = vmatmul.f32.gmra.mxu0 %v753
    %v1260 = vpop.f32.mrf.mxu0
    %v1261 = vadd.f32 %v1238, %v1260
    %1262 = vmatmul.f32.gmra.mxu0 %v769
    %v1263 = vpop.f32.mrf.mxu0
    %v1264 = vadd.f32 %v1241, %v1263
    %1265 = vdwg.mxu0
    %1266 = vmatpush.msra.mxu0 %v951
    %1267 = vmatpush.msra.mxu0 %v950
    %1268 = vmatpush.msra.mxu0 %v949
    %1269 = vmatpush.msra.mxu0 %v948
    %1270 = vmatpush.msra.mxu0 %v947
    %1271 = vmatpush.msra.mxu0 %v946
    %1272 = vmatpush.msra.mxu0 %v945
    %1273 = vmatpush.msra.mxu0 %v944
    %1274 = vmatpush.msra.mxu0 %v943
    %1275 = vmatpush.msra.mxu0 %v942
    %1276 = vmatpush.msra.mxu0 %v941
    %1277 = vmatpush.msra.mxu0 %v940
    %1278 = vmatpush.msra.mxu0 %v939
    %1279 = vmatpush.msra.mxu0 %v938
    %1280 = vmatpush.msra.mxu0 %v937
    %1281 = vmatpush.msra.mxu0 %v936
    %1282 = vmatmul.f32.gmra.mxu0 %v754
    %v1283 = vpop.f32.mrf.mxu0
    %v1284 = vadd.f32 %v1261, %v1283
    %1285 = vmatmul.f32.gmra.mxu0 %v770
    %v1286 = vpop.f32.mrf.mxu0
    %v1287 = vadd.f32 %v1264, %v1286
    %1288 = vdwg.mxu0
    %1289 = vmatpush.msra.mxu0 %v967
    %1290 = vmatpush.msra.mxu0 %v966
    %1291 = vmatpush.msra.mxu0 %v965
    %1292 = vmatpush.msra.mxu0 %v964
    %1293 = vmatpush.msra.mxu0 %v963
    %1294 = vmatpush.msra.mxu0 %v962
    %1295 = vmatpush.msra.mxu0 %v961
    %1296 = vmatpush.msra.mxu0 %v960
    %1297 = vmatpush.msra.mxu0 %v959
    %1298 = vmatpush.msra.mxu0 %v958
    %1299 = vmatpush.msra.mxu0 %v957
    %1300 = vmatpush.msra.mxu0 %v956
    %1301 = vmatpush.msra.mxu0 %v955
    %1302 = vmatpush.msra.mxu0 %v954
    %1303 = vmatpush.msra.mxu0 %v953
    %1304 = vmatpush.msra.mxu0 %v952
    %1305 = vmatmul.f32.gmra.mxu0 %v755
    %v1306 = vpop.f32.mrf.mxu0
    %v1307 = vadd.f32 %v1284, %v1306
    %1308 = vmatmul.f32.gmra.mxu0 %v771
    %v1309 = vpop.f32.mrf.mxu0
    %v1310 = vadd.f32 %v1287, %v1309
    %1311 = vdwg.mxu0
    %1312 = vmatpush.msra.mxu0 %v983
    %1313 = vmatpush.msra.mxu0 %v982
    %1314 = vmatpush.msra.mxu0 %v981
    %1315 = vmatpush.msra.mxu0 %v980
    %1316 = vmatpush.msra.mxu0 %v979
    %1317 = vmatpush.msra.mxu0 %v978
    %1318 = vmatpush.msra.mxu0 %v977
    %1319 = vmatpush.msra.mxu0 %v976
    %1320 = vmatpush.msra.mxu0 %v975
    %1321 = vmatpush.msra.mxu0 %v974
    %1322 = vmatpush.msra.mxu0 %v973
    %1323 = vmatpush.msra.mxu0 %v972
    %1324 = vmatpush.msra.mxu0 %v971
    %1325 = vmatpush.msra.mxu0 %v970
    %1326 = vmatpush.msra.mxu0 %v969
    %1327 = vmatpush.msra.mxu0 %v968
    %1328 = vmatmul.f32.gmra.mxu0 %v756
    %v1329 = vpop.f32.mrf.mxu0
    %v1330 = vadd.f32 %v1307, %v1329
    %1331 = vmatmul.f32.gmra.mxu0 %v772
    %v1332 = vpop.f32.mrf.mxu0
    %v1333 = vadd.f32 %v1310, %v1332
    %1334 = vdwg.mxu0
    %1335 = vmatpush.msra.mxu0 %v999
    %1336 = vmatpush.msra.mxu0 %v998
    %1337 = vmatpush.msra.mxu0 %v997
    %1338 = vmatpush.msra.mxu0 %v996
    %1339 = vmatpush.msra.mxu0 %v995
    %1340 = vmatpush.msra.mxu0 %v994
    %1341 = vmatpush.msra.mxu0 %v993
    %1342 = vmatpush.msra.mxu0 %v992
    %1343 = vmatpush.msra.mxu0 %v991
    %1344 = vmatpush.msra.mxu0 %v990
    %1345 = vmatpush.msra.mxu0 %v989
    %1346 = vmatpush.msra.mxu0 %v988
    %1347 = vmatpush.msra.mxu0 %v987
    %1348 = vmatpush.msra.mxu0 %v986
    %1349 = vmatpush.msra.mxu0 %v985
    %1350 = vmatpush.msra.mxu0 %v984
    %1351 = vmatmul.f32.gmra.mxu0 %v757
    %v1352 = vpop.f32.mrf.mxu0
    %v1353 = vadd.f32 %v1330, %v1352
    %1354 = vmatmul.f32.gmra.mxu0 %v773
    %v1355 = vpop.f32.mrf.mxu0
    %v1356 = vadd.f32 %v1333, %v1355
    %1357 = vdwg.mxu0
    %1358 = vmatpush.msra.mxu0 %v1015
    %1359 = vmatpush.msra.mxu0 %v1014
    %1360 = vmatpush.msra.mxu0 %v1013
    %1361 = vmatpush.msra.mxu0 %v1012
    %1362 = vmatpush.msra.mxu0 %v1011
    %1363 = vmatpush.msra.mxu0 %v1010
    %1364 = vmatpush.msra.mxu0 %v1009
    %1365 = vmatpush.msra.mxu0 %v1008
    %1366 = vmatpush.msra.mxu0 %v1007
    %1367 = vmatpush.msra.mxu0 %v1006
    %1368 = vmatpush.msra.mxu0 %v1005
    %1369 = vmatpush.msra.mxu0 %v1004
    %1370 = vmatpush.msra.mxu0 %v1003
    %1371 = vmatpush.msra.mxu0 %v1002
    %1372 = vmatpush.msra.mxu0 %v1001
    %1373 = vmatpush.msra.mxu0 %v1000
    %1374 = vmatmul.f32.gmra.mxu0 %v758
    %v1375 = vpop.f32.mrf.mxu0
    %v1376 = vadd.f32 %v1353, %v1375
    %1377 = vmatmul.f32.gmra.mxu0 %v774
    %v1378 = vpop.f32.mrf.mxu0
    %v1379 = vadd.f32 %v1356, %v1378
    %1380 = vdwg.mxu0
    %1381 = vmatpush.msra.mxu0 %v1031
    %1382 = vmatpush.msra.mxu0 %v1030
    %1383 = vmatpush.msra.mxu0 %v1029
    %1384 = vmatpush.msra.mxu0 %v1028
    %1385 = vmatpush.msra.mxu0 %v1027
    %1386 = vmatpush.msra.mxu0 %v1026
    %1387 = vmatpush.msra.mxu0 %v1025
    %1388 = vmatpush.msra.mxu0 %v1024
    %1389 = vmatpush.msra.mxu0 %v1023
    %1390 = vmatpush.msra.mxu0 %v1022
    %1391 = vmatpush.msra.mxu0 %v1021
    %1392 = vmatpush.msra.mxu0 %v1020
    %1393 = vmatpush.msra.mxu0 %v1019
    %1394 = vmatpush.msra.mxu0 %v1018
    %1395 = vmatpush.msra.mxu0 %v1017
    %1396 = vmatpush.msra.mxu0 %v1016
    %1397 = vmatmul.f32.gmra.mxu0 %v759
    %v1398 = vpop.f32.mrf.mxu0
    %v1399 = vadd.f32 %v1376, %v1398
    %1400 = vmatmul.f32.gmra.mxu0 %v775
    %v1401 = vpop.f32.mrf.mxu0
    %v1402 = vadd.f32 %v1379, %v1401
    %1403 = vdwg.mxu0
    %1404 = vst [vmem:[#allocation10] sm:$0xff] %v1399
    %1405 = vst [vmem:[#allocation10 + $0x8] sm:$0xff] %v1402
    // Predicated region
    $region38: #{tpu_custom_call.1} parent=1 // pred_check
      _
    $region39: #{tpu_custom_call.1} parent=1 // pred_check_branch
      %1407 = sbr.rel (0) target = $region41
    $region40: #{tpu_custom_call.1} parent=1 // pred_region
      %1409 = vsyncadd [#allocation4], 0
      %s1410 = sshll.u32 [#allocation10], 4
      %s1411 = int_to_ptr.vmem [resolvable:$true] %s1410
      %s1412 = sshll.u32 %s5, 4
      %s1413 = int_to_ptr.hbm [resolvable:$true] %s1412
      %1418 = dma.vmem_to_hbm [thread:$0]  %s1411, 256, %s1413, [#allocation4], 128, 128, 8
    $region41: #{tpu_custom_call.1} parent=1 // pred_fallthru
      _
    // Predicated region
    $region42: #{tpu_custom_call.1} parent=1 // pred_check
      _
    $region43: #{tpu_custom_call.1} parent=1 // pred_check_branch
      %1420 = sbr.rel (0) target = $region45
    $region44: #{tpu_custom_call.1} parent=1 // pred_region
      %1422 = dma.done [#allocation4], 256
    $region45: #{tpu_custom_call.1} parent=1 // pred_fallthru
      _
    %1423 = vsyncpa [#allocation3], 1
    %1424 = vsyncpa [#allocation6], 1
    %1425 = vsyncpa [#allocation9], 1
    %1426 = vsyncpa [#allocation4], 1

</llo_original>
